<compile_context>
chip_gen: v7x
topology: tpu7x:2x2x1
jax: 0.10.0
libtpu: 0.0.40
codegen_flags: <defaults>
</compile_context>

<pallas_src>
import functools
import numpy as np
import jax
import jax.numpy as jnp
from jax import lax
from jax.experimental import pallas as pl
from jax.experimental.pallas import tpu as pltpu


# ----------------------------------------------------------------------------
# Label dictionary + constraint set (built in-script, deterministic).
# ----------------------------------------------------------------------------
PHRASE_TYPES = ['NP', 'VP', 'ADVP', 'ADJP', 'SBAR', 'PP', 'PRT', 'LST',
                'CONJP', 'UCP', 'INTJ']

# 22 B-/I- labels + 'O'  (== opt.num_label) + 2 specials  -> num_label = 25
LABELS = [f'{p}-{t}' for t in PHRASE_TYPES for p in ('B', 'I')] + ['O', '<s>', '</s>']
LABEL_DICT = {name: i for i, name in enumerate(LABELS)}
NUM_LABEL = len(LABELS)  # 25

# 'B-X implies -(I-Y)' for every X != Y  -> 110 constraints
CONSTRAINTS = [(f'B-{x}', f'I-{y}')
               for x in PHRASE_TYPES for y in PHRASE_TYPES if y != x]
NUM_CONSTRAINTS = len(CONSTRAINTS)  # 110
C_PAD = 128                         # constraints padded to an aligned 128 rows

NEG_PAD = -1.0e4                    # log-prob used for padded tokens (exp -> 0)


def build_fused_selector():
    """Fused one-hot selector (2*C_PAD, L): rows [0,110) pick P(B-X),
    rows [128,238) pick P(I-Y); padding rows are all-zero (contribute 0 loss)."""
    sel = np.zeros((2 * C_PAD, NUM_LABEL), dtype=np.float32)
    for c, (left_str, right_str) in enumerate(CONSTRAINTS):
        sel[c, LABEL_DICT[left_str]] = 1.0
        sel[C_PAD + c, LABEL_DICT[right_str]] = 1.0
    return jnp.asarray(sel)


# ----------------------------------------------------------------------------
# Pallas kernel: NLL(sum) + constrained r_prod t-norm loss (per-tile partials).
# ----------------------------------------------------------------------------
def _loss_kernel(logp_ref, gold_ref, sel_ref, out_ref, *, constraints_lambda):
    i = pl.program_id(1)

    @pl.when(i == 0)
    def _init():
        out_ref[...] = jnp.zeros_like(out_ref)

    logp = logp_ref[...]                              # (L, TN) log-probs
    gold = gold_ref[...]                              # (1, TN) int32 labels (L for pad)

    # --- NLLLoss(reduction='sum'): -sum_n logp[gold[n], n] -------------------
    lab = lax.broadcasted_iota(jnp.int32, logp.shape, 0)          # (L, TN)
    nll = -jnp.sum(jnp.where(lab == gold, logp, 0.0))

    # --- constraint loss (r_prod t-norm, 'B-X implies -(I-Y)') ---------------
    # pred is log-softmax, so softmax over the label axis == exp(logp).
    prob = jnp.exp(logp)                                          # (L, TN)
    scores = jnp.dot(sel_ref[...], prob,
                     preferred_element_type=jnp.float32)          # (2*C_PAD, TN)
    half = sel_ref.shape[0] // 2
    left = scores[:half, :]                                       # P(B-X)   (pad rows: 0)
    right = 1.0 - scores[half:, :]                                # 1-P(I-Y) (pad rows: 1)
    # -log(min(1, right / (left + 0.001)))  ==  relu(log(left + 0.001) - log(right))
    closs = jnp.sum(jnp.maximum(jnp.log(left + 0.001) - jnp.log(right), 0.0))

    out_ref[...] += jnp.reshape(nll + constraints_lambda * closs, (1, 1, 1))


def loss_forward(pred, gold, constraints_lambda=0.001, tile_n=512, num_parallel=2):
    """pred: (B, S, L) float32 log-probs; gold: (B, S) int labels."""
    B, S, L = pred.shape
    assert L == NUM_LABEL
    N = B * S

    # pad token axis so it splits into num_parallel * tiles_per_core * tile_n
    tiles_per_core = max(1, -(-N // (num_parallel * tile_n)))
    n_pad = num_parallel * tiles_per_core * tile_n

    # lane-dense layout: labels on sublanes, tokens on lanes
    logp_t = jnp.transpose(pred.reshape(N, L).astype(jnp.float32))        # (L, N)
    logp_t = jnp.pad(logp_t, ((0, 0), (0, n_pad - N)), constant_values=NEG_PAD)
    gold_row = jnp.pad(gold.reshape(-1).astype(jnp.int32), (0, n_pad - N),
                       constant_values=L).reshape(1, n_pad)
    sel = build_fused_selector()                                          # (256, L)

    kernel = functools.partial(_loss_kernel, constraints_lambda=constraints_lambda)
    g2 = tiles_per_core

    cost = pl.CostEstimate(
        flops=2 * n_pad * L * (2 * C_PAD),
        transcendentals=n_pad * (L + 2 * C_PAD),
        bytes_accessed=4 * n_pad * L + 4 * n_pad + 4 * 2 * C_PAD * L,
    )

    partials = pl.pallas_call(
        kernel,
        out_shape=jax.ShapeDtypeStruct((num_parallel, 1, 1), jnp.float32),
        grid=(num_parallel, g2),
        in_specs=[
            pl.BlockSpec((L, tile_n), lambda p, i: (0, p * g2 + i)),      # logp_t
            pl.BlockSpec((1, tile_n), lambda p, i: (0, p * g2 + i)),      # gold row
            pl.BlockSpec((2 * C_PAD, L), lambda p, i: (0, 0)),            # selector (resident)
        ],
        out_specs=pl.BlockSpec((1, 1, 1), lambda p, i: (p, 0, 0)),
        compiler_params=pltpu.CompilerParams(
            dimension_semantics=("parallel", "arbitrary")),
        cost_estimate=cost,
    )(logp_t, gold_row, sel)
    return jnp.sum(partials)


# ----------------------------------------------------------------------------
# Pure-JAX reference (for correctness check only).
# ----------------------------------------------------------------------------
def loss_reference(pred, gold, constraints_lambda=0.001):
    B, S, L = pred.shape
    lsel = np.zeros((L, NUM_CONSTRAINTS), dtype=np.float32)
    rsel = np.zeros((L, NUM_CONSTRAINTS), dtype=np.float32)
    for c, (left_str, right_str) in enumerate(CONSTRAINTS):
        lsel[LABEL_DICT[left_str], c] = 1.0
        rsel[LABEL_DICT[right_str], c] = 1.0
    lsel, rsel = jnp.asarray(lsel), jnp.asarray(rsel)

    flat = pred.reshape(-1, L)
    fg = gold.reshape(-1)
    nll = -jnp.sum(flat[jnp.arange(flat.shape[0]), fg])
    prob = jax.nn.softmax(pred, axis=-1)
    left = jnp.einsum('bsl,lc->bsc', prob, lsel)
    right = 1.0 - jnp.einsum('bsl,lc->bsc', prob, rsel)
    elements = jnp.minimum(1.0, right / (left + 0.001))
    closs = -jnp.sum(jnp.log(elements))
    return nll + constraints_lambda * closs


if __name__ == "__main__":
    key = jax.random.PRNGKey(0)
    k_logits, k_gold = jax.random.split(key)

    B, S, L = 2, 8, NUM_LABEL  # batch=2, padded_seq=8, num_label=25 (=23+2)

    logits = jax.random.normal(k_logits, (B, S, L), dtype=jnp.float32)
    pred = jax.nn.log_softmax(logits, axis=-1)          # module expects log-probs
    gold = jax.random.randint(k_gold, (B, S), 0, L, dtype=jnp.int32)

    out = loss_forward(pred, gold)
    out = jax.block_until_ready(out)

    ref = jax.block_until_ready(loss_reference(pred, gold))
    np.testing.assert_allclose(np.asarray(out), np.asarray(ref), rtol=1e-4, atol=1e-4)

    print("KERNEL_OK")
</pallas_src>

<mosaic_0001>
module attributes {stable_mosaic.version = 11 : i64} {
  func.func @_loss_kernel(%arg0: i32, %arg1: i32, %arg2: memref<25x512xf32, #tpu.memory_space<vmem>>, %arg3: memref<1x512xi32, #tpu.memory_space<vmem>>, %arg4: memref<256x25xf32, #tpu.memory_space<vmem>>, %arg5: memref<1x1x1xf32, #tpu.memory_space<vmem>>) attributes {dimension_semantics = [#tpu.dimension_semantics<parallel>, #tpu.dimension_semantics<arbitrary>], iteration_bounds = array<i64: 2, 1>, scalar_prefetch = 0 : i64, scratch_operands = 0 : i64, tpu.core_type = #tpu.core_type<tc>, window_params = [{transform_indices = @transform_0, window_bounds = array<i64: 25, 512>}, {transform_indices = @transform_1, window_bounds = array<i64: 1, 512>}, {pipeline_mode = #tpu.pipeline_mode<synchronous>, transform_indices = @transform_2, window_bounds = array<i64: 256, 25>}, {transform_indices = @transform_3, window_bounds = array<i64: 1, 1, 1>}]} {
    %c0_i32 = arith.constant 0 : i32
    %0 = arith.cmpi eq, %arg1, %c0_i32 : i32
    %1 = arith.extui %0 : i1 to i32
    %c0_i32_0 = arith.constant 0 : i32
    %2 = arith.cmpi ne, %1, %c0_i32_0 : i32
    scf.if %2 {
      %cst_20 = arith.constant 0.000000e+00 : f32
      %39 = vector.broadcast %cst_20 : f32 to vector<1x1x1xf32>
      %c0_21 = arith.constant 0 : index
      %c0_22 = arith.constant 0 : index
      %c0_23 = arith.constant 0 : index
      %40 = vector.load %arg5[%c0_21, %c0_22, %c0_23] : memref<1x1x1xf32, #tpu.memory_space<vmem>>, vector<1x1x1xf32>
      tpu.vector_store %arg5[%c0_21, %c0_22, %c0_23], %39 {strides = array<i32>} : memref<1x1x1xf32, #tpu.memory_space<vmem>>, vector<1x1x1xf32>,
    } else {
    }
    %c0 = arith.constant 0 : index
    %c0_1 = arith.constant 0 : index
    %3 = vector.load %arg2[%c0, %c0_1] : memref<25x512xf32, #tpu.memory_space<vmem>>, vector<25x512xf32>
    %c0_2 = arith.constant 0 : index
    %c0_3 = arith.constant 0 : index
    %4 = vector.load %arg3[%c0_2, %c0_3] : memref<1x512xi32, #tpu.memory_space<vmem>>, vector<1x512xi32>
    %5 = tpu.iota {dimensions = array<i32: 0>} : vector<25x512xi32>
    %6 = vector.broadcast %4 : vector<1x512xi32> to vector<25x512xi32>
    %7 = arith.cmpi eq, %5, %6 : vector<25x512xi32>
    %cst = arith.constant 0.000000e+00 : f32
    %8 = vector.broadcast %cst : f32 to vector<25x512xf32>
    %9 = arith.select %7, %3, %8 : vector<25x512xi1>, vector<25x512xf32>
    %10 = vector.shape_cast %9 : vector<25x512xf32> to vector<1x25x512xf32>
    %cst_4 = arith.constant dense<0.000000e+00> : vector<1xf32>
    %11 = vector.multi_reduction <add>, %10, %cst_4 [1, 2] : vector<1x25x512xf32> to vector<1xf32>
    %12 = vector.shape_cast %11 : vector<1xf32> to vector<1x1x1xf32>
    %13 = vector.extract %12[0, 0, 0] : f32 from vector<1x1x1xf32>
    %cst_5 = arith.constant 0.000000e+00 : f32
    %14 = arith.subf %cst_5, %13 : f32
    %15 = math.exp %3 : vector<25x512xf32>
    %c0_6 = arith.constant 0 : index
    %c0_7 = arith.constant 0 : index
    %16 = vector.load %arg4[%c0_6, %c0_7] : memref<256x25xf32, #tpu.memory_space<vmem>>, vector<256x25xf32>
    %cst_8 = arith.constant dense<0.000000e+00> : vector<256x512xf32>
    %17 = tpu.matmul %16, %15, %cst_8 {dimension_numbers = #tpu.dot_dimension_numbers<[1], [0], [0], [1], [0, 0, 1, 1], [], []>} : vector<256x25xf32>, vector<25x512xf32>, vector<256x512xf32> -> vector<256x512xf32>
    %18 = vector.extract_strided_slice %17 {offsets = [0, 0], sizes = [128, 512], strides = [1, 1]} : vector<256x512xf32> to vector<128x512xf32>
    %19 = vector.extract_strided_slice %17 {offsets = [128, 0], sizes = [128, 512], strides = [1, 1]} : vector<256x512xf32> to vector<128x512xf32>
    %cst_9 = arith.constant 1.000000e+00 : f32
    %20 = vector.broadcast %cst_9 : f32 to vector<128x512xf32>
    %21 = arith.subf %20, %19 : vector<128x512xf32>
    %cst_10 = arith.constant 1.000000e-03 : f32
    %22 = vector.broadcast %cst_10 : f32 to vector<128x512xf32>
    %23 = arith.addf %18, %22 : vector<128x512xf32>
    %24 = math.log %23 : vector<128x512xf32>
    %25 = math.log %21 : vector<128x512xf32>
    %26 = arith.subf %24, %25 : vector<128x512xf32>
    %cst_11 = arith.constant 0.000000e+00 : f32
    %27 = vector.broadcast %cst_11 : f32 to vector<128x512xf32>
    %28 = arith.maximumf %26, %27 : vector<128x512xf32>
    %29 = vector.shape_cast %28 : vector<128x512xf32> to vector<1x128x512xf32>
    %cst_12 = arith.constant dense<0.000000e+00> : vector<1xf32>
    %30 = vector.multi_reduction <add>, %29, %cst_12 [1, 2] : vector<1x128x512xf32> to vector<1xf32>
    %31 = vector.shape_cast %30 : vector<1xf32> to vector<1x1x1xf32>
    %32 = vector.extract %31[0, 0, 0] : f32 from vector<1x1x1xf32>
    %c0_13 = arith.constant 0 : index
    %c0_14 = arith.constant 0 : index
    %c0_15 = arith.constant 0 : index
    %33 = vector.load %arg5[%c0_13, %c0_14, %c0_15] : memref<1x1x1xf32, #tpu.memory_space<vmem>>, vector<1x1x1xf32>
    %cst_16 = arith.constant 1.000000e-03 : f32
    %34 = arith.mulf %cst_16, %32 : f32
    %35 = arith.addf %14, %34 : f32
    %36 = vector.broadcast %35 : f32 to vector<1x1x1xf32>
    %37 = arith.addf %33, %36 : vector<1x1x1xf32>
    %c0_17 = arith.constant 0 : index
    %c0_18 = arith.constant 0 : index
    %c0_19 = arith.constant 0 : index
    %38 = vector.load %arg5[%c0_17, %c0_18, %c0_19] : memref<1x1x1xf32, #tpu.memory_space<vmem>>, vector<1x1x1xf32>
    tpu.vector_store %arg5[%c0_17, %c0_18, %c0_19], %37 {strides = array<i32>} : memref<1x1x1xf32, #tpu.memory_space<vmem>>, vector<1x1x1xf32>,
    return
  }
  func.func @transform_0(%arg0: i32, %arg1: i32) -> (i32, i32) {
    %c1_i32 = arith.constant 1 : i32
    %0 = arith.muli %arg0, %c1_i32 : i32
    %1 = arith.addi %0, %arg1 : i32
    %c0_i32 = arith.constant 0 : i32
    %c0_i32_0 = arith.constant 0 : i32
    return %c0_i32, %1 : i32, i32
  }
  func.func @transform_1(%arg0: i32, %arg1: i32) -> (i32, i32) {
    %c1_i32 = arith.constant 1 : i32
    %0 = arith.muli %arg0, %c1_i32 : i32
    %1 = arith.addi %0, %arg1 : i32
    %c0_i32 = arith.constant 0 : i32
    %c0_i32_0 = arith.constant 0 : i32
    return %c0_i32, %1 : i32, i32
  }
  func.func @transform_2(%arg0: i32, %arg1: i32) -> (i32, i32) {
    %c0_i32 = arith.constant 0 : i32
    %c0_i32_0 = arith.constant 0 : i32
    %c0_i32_1 = arith.constant 0 : i32
    return %c0_i32, %c0_i32_0 : i32, i32
  }
  func.func @transform_3(%arg0: i32, %arg1: i32) -> (i32, i32, i32) {
    %c0_i32 = arith.constant 0 : i32
    %c0_i32_0 = arith.constant 0 : i32
    %c0_i32_1 = arith.constant 0 : i32
    return %arg0, %c0_i32, %c0_i32_0 : i32, i32, i32
  }
}

</mosaic_0001>

<llo_original>
// kernel: tpu_custom_call.1
$region0: #{tpu_custom_call.1}
  #allocation0 [shape = 'u32[]', space=smem, size = 0x4, offset = 0x4, fixed_abs, tag = 'smem constant byte address 0x4 - core index']
  #allocation1 [shape = 'u32[144,128]{1,0:T(1,128)}', space=vmem, size = 0x12000, scoped, tag = 'internal scratch']
  %s0 = inlined_call_operand.vmem [shape: f32[25,1024], index: 0, kind: input, shape index: {}]
  %s1 = inlined_call_operand.vmem [shape: s32[1,1024], index: 1, kind: input, shape index: {}]
  %s2 = inlined_call_operand.vmem [shape: f32[256,25], index: 2, kind: input, shape index: {}]
  %s3 = inlined_call_operand.vmem [shape: f32[2,1,1], index: 3, kind: output, shape index: {}]
  %s4 = sld [smem:[#allocation0]]
  $region72: #{tpu_custom_call.1} parent=0
    _
  %s6 = ssub.s32 1, %s4
  %s7 = scalar_select 0, %s6, %s4
  $region1: #{tpu_custom_call.1} parent=0
    #allocation2 [shape = 'u8[131072]{0}', space=vmem, size = 0x20000, scoped, tag = 'input window, operand 0']
    loop: start=0, step=1, limit=4
    $region2: #{tpu_custom_call.1} parent=1 // loop_pre_header
      _
    $region3: #{tpu_custom_call.1} parent=1 // loop_header
      %s9 = sphi 0, %s13
      %p10 = scmp.ge.s32.totalorder %s9, 4
      %s16 = sphi 0, %s28
      %s17 = sphi 0, %s24
      %s18 = sphi 0, %s16
      %s19 = sphi 0, %s17
      %s20 = sphi 0, %s18
      %s21 = sphi 0, %s19
      %s33 = sphi 0, %s35
      %s36 = sphi 0, %s33
      %s37 = sphi 0, %s36
      %s53 = sphi 0, %s37
      %s61 = sphi 0, %s63
      %s64 = sphi 0, %s61
      %s65 = sphi 0, %s64
      %s81 = sphi 0, %s65
      %s85 = sphi 0, %s85
      %s87 = sphi 0, %s85
      %s88 = sphi 0, %s87
      %s102 = sphi 0, %s88
      %s108 = sphi 0, %s110
      %s111 = sphi 0, %s108
      %s112 = sphi 0, %s111
      %s128 = sphi 0, %s112
    $region4: #{tpu_custom_call.1} parent=1 // loop_header_branch
      %12 = sbr.rel (%p10) target = $region8
    $region5: #{tpu_custom_call.1} parent=1 // loop_body
      %s14 = ssub.s32 %s9, 1
      %s15 = ssub.s32 %s9, 2
      %s22 = sadd.s32 1, %s17
      %p23 = scmp.ge.s32.totalorder %s22, 1
      %s24 = scalar_select %p23, 0, %s22
      %s25 = sadd.s32 1, %s16
      %s26 = scalar_select %p23, %s25, %s16
      %p27 = scmp.ge.s32.totalorder %s26, 2
      %s28 = scalar_select %p27, 0, %s26
      %s29 = sadd.s32 %s16, %s17
      %s30 = sadd.s32 %s28, %s24
      %s31 = ssub.s32 %s29, %s30
      %p32 = scmp.eq.s32.totalorder %s31, 0
      %s34 = sadd.s32 %s33, 1
      %s35 = scalar_select %p32, %s33, %s34
      %p38 = pneg %p32
      %p39 = scmp.eq.s32.totalorder %s9, 1
      %p40 = por %p38, %p39
      %p41 = scmp.ne.s32.totalorder %s33, %s36
      %p42 = scmp.eq.s32.totalorder %s9, 0
      %p43 = por %p41, %p42
      %p44 = scmp.ne.s32.totalorder %s33, %s36
      %p45 = scmp.eq.s32.totalorder %s14, 1
      %p46 = por %p44, %p45
      %p47 = scmp.ne.s32.totalorder %s36, %s37
      %p48 = scmp.eq.s32.totalorder %s14, 0
      %p49 = por %p47, %p48
      %p50 = scmp.ne.s32.totalorder %s36, %s37
      %p51 = scmp.eq.s32.totalorder %s15, 1
      %p52 = por %p50, %p51
      %p54 = scmp.ne.s32.totalorder %s37, %s53
      %p55 = scmp.eq.s32.totalorder %s15, 0
      %p56 = por %p54, %p55
      %s57 = sadd.s32 %s16, %s17
      %s58 = sadd.s32 %s28, %s24
      %s59 = ssub.s32 %s57, %s58
      %p60 = scmp.eq.s32.totalorder %s59, 0
      %s62 = sadd.s32 %s61, 1
      %s63 = scalar_select %p60, %s61, %s62
      %p66 = pneg %p60
      %p67 = scmp.eq.s32.totalorder %s9, 1
      %p68 = por %p66, %p67
      %p69 = scmp.ne.s32.totalorder %s61, %s64
      %p70 = scmp.eq.s32.totalorder %s9, 0
      %p71 = por %p69, %p70
      %p72 = scmp.ne.s32.totalorder %s61, %s64
      %p73 = scmp.eq.s32.totalorder %s14, 1
      %p74 = por %p72, %p73
      %p75 = scmp.ne.s32.totalorder %s64, %s65
      %p76 = scmp.eq.s32.totalorder %s14, 0
      %p77 = por %p75, %p76
      %p78 = scmp.ne.s32.totalorder %s64, %s65
      %p79 = scmp.eq.s32.totalorder %s15, 1
      %p80 = por %p78, %p79
      %p82 = scmp.ne.s32.totalorder %s65, %s81
      %p83 = scmp.eq.s32.totalorder %s15, 0
      %p84 = por %p82, %p83
      %s86 = sadd.s32 %s85, 1
      %p89 = scmp.eq.s32.totalorder %s9, 1
      %p90 = scmp.ne.s32.totalorder %s85, %s87
      %p91 = scmp.eq.s32.totalorder %s9, 0
      %p92 = por %p90, %p91
      %p93 = scmp.ne.s32.totalorder %s85, %s87
      %p94 = scmp.eq.s32.totalorder %s14, 1
      %p95 = por %p93, %p94
      %p96 = scmp.ne.s32.totalorder %s87, %s88
      %p97 = scmp.eq.s32.totalorder %s14, 0
      %p98 = por %p96, %p97
      %p99 = scmp.ne.s32.totalorder %s87, %s88
      %p100 = scmp.eq.s32.totalorder %s15, 1
      %p101 = por %p99, %p100
      %p103 = scmp.ne.s32.totalorder %s88, %s102
      %p104 = scmp.eq.s32.totalorder %s15, 0
      %p105 = por %p103, %p104
      %s106 = ssub.s32 %s16, %s28
      %p107 = scmp.eq.s32.totalorder %s106, 0
      %s109 = sadd.s32 %s108, 1
      %s110 = scalar_select %p107, %s108, %s109
      %p113 = pneg %p107
      %p114 = scmp.eq.s32.totalorder %s9, 1
      %p115 = por %p113, %p114
      %p116 = scmp.ne.s32.totalorder %s108, %s111
      %p117 = scmp.eq.s32.totalorder %s9, 0
      %p118 = por %p116, %p117
      %p119 = scmp.ne.s32.totalorder %s108, %s111
      %p120 = scmp.eq.s32.totalorder %s14, 1
      %p121 = por %p119, %p120
      %p122 = scmp.ne.s32.totalorder %s111, %s112
      %p123 = scmp.eq.s32.totalorder %s14, 0
      %p124 = por %p122, %p123
      %p125 = scmp.ne.s32.totalorder %s111, %s112
      %p126 = scmp.eq.s32.totalorder %s15, 1
      %p127 = por %p125, %p126
      %p129 = scmp.ne.s32.totalorder %s112, %s128
      %p130 = scmp.eq.s32.totalorder %s15, 0
      %p131 = por %p129, %p130
      %p132 = scmp.le.s32.totalorder 1, %s9
      %p133 = scmp.lt.s32.totalorder %s9, 3
      %p134 = pnand %p132, %p133
      %p135 = pneg %p134
      // Predicated region
      $region9: #{tpu_custom_call.1} parent=5 // pred_check
        _
      $region10: #{tpu_custom_call.1} parent=5 // pred_check_branch
        %137 = sbr.rel (%p134) target = $region12
      $region11: #{tpu_custom_call.1} parent=5 // pred_region
        %s138 = ssub.s32 %s9, 1
        // Predicated region
        $region13: #{tpu_custom_call.1} parent=11 // pred_check
          %p139 = pneg %p98
        $region14: #{tpu_custom_call.1} parent=11 // pred_check_branch
          %141 = sbr.rel (%p139) target = $region16
        $region15: #{tpu_custom_call.1} parent=11 // pred_region
          _
        $region16: #{tpu_custom_call.1} parent=11 // pred_fallthru
          _
      $region12: #{tpu_custom_call.1} parent=5 // pred_fallthru
        _
      %p142 = scmp.lt.s32.totalorder %s9, 2
      // Predicated region
      $region17: #{tpu_custom_call.1} parent=5 // pred_check
        %p143 = pneg %p142
      $region18: #{tpu_custom_call.1} parent=5 // pred_check_branch
        %145 = sbr.rel (%p143) target = $region20
      $region19: #{tpu_custom_call.1} parent=5 // pred_region
        // Predicated region
        $region21: #{tpu_custom_call.1} parent=19 // pred_check
          %p146 = pneg %p43
        $region22: #{tpu_custom_call.1} parent=19 // pred_check_branch
          %148 = sbr.rel (%p146) target = $region24
        $region23: #{tpu_custom_call.1} parent=19 // pred_region
          %s149 = sand.u32 %s33, 1
          %s150 = sand.u32 %s33, 1
          %s151 = smul.addr %s150, 128
          %s152 = scalar_lea.vmem [#allocation2], %s151
          %s153 = sadd.s32 %s16, %s17
          %s154 = smul.u32 4, %s153
          %s155 = smul.addr %s154, 8
          %s156 = scalar_lea.vmem %s0, %s155
          // Predicated region
          $region25: #{tpu_custom_call.1} parent=23 // pred_check
            _
          $region26: #{tpu_custom_call.1} parent=23 // pred_check_branch
            %158 = sbr.rel (0) target = $region28
          $region27: #{tpu_custom_call.1} parent=23 // pred_region
            // Predicated region
            $region29: #{tpu_custom_call.1} parent=27 // pred_check
              _
            $region30: #{tpu_custom_call.1} parent=27 // pred_check_branch
              %160 = sbr.rel (0) target = $region32
            $region31: #{tpu_custom_call.1} parent=27 // pred_region
              loop: start=0, step=1, limit=1
              $region33: #{tpu_custom_call.1} parent=31 // loop_pre_header
                _
              $region34: #{tpu_custom_call.1} parent=31 // loop_header
                %s162 = sphi 0, %s166
                %p163 = scmp.ge.s32.totalorder %s162, 1
                %s167 = sphi %s156, %s156
                %s168 = sphi %s152, %s152
              $region35: #{tpu_custom_call.1} parent=31 // loop_header_branch
                %165 = sbr.rel (%p163) target = $region39
              $region36: #{tpu_custom_call.1} parent=31 // loop_body
                %v169 = vld [vmem:[%s167] sm:$0xff]
                %170 = vst [vmem:[%s168] sm:$0xff] %v169
                %v171 = vld [vmem:[%s167 + $0x8] sm:$0xff]
                %172 = vst [vmem:[%s168 + $0x8] sm:$0xff] %v171
                %v173 = vld [vmem:[%s167 + $0x10] sm:$0xff]
                %174 = vst [vmem:[%s168 + $0x10] sm:$0xff] %v173
                %v175 = vld [vmem:[%s167 + $0x18] sm:$0xff]
                %176 = vst [vmem:[%s168 + $0x18] sm:$0xff] %v175
                %v177 = vld [vmem:[%s167 + $0x40] sm:$0xff]
                %178 = vst [vmem:[%s168 + $0x20] sm:$0xff] %v177
                %v179 = vld [vmem:[%s167 + $0x48] sm:$0xff]
                %180 = vst [vmem:[%s168 + $0x28] sm:$0xff] %v179
                %v181 = vld [vmem:[%s167 + $0x50] sm:$0xff]
                %182 = vst [vmem:[%s168 + $0x30] sm:$0xff] %v181
                %v183 = vld [vmem:[%s167 + $0x58] sm:$0xff]
                %184 = vst [vmem:[%s168 + $0x38] sm:$0xff] %v183
                %v185 = vld [vmem:[%s167 + $0x80] sm:$0xff]
                %186 = vst [vmem:[%s168 + $0x40] sm:$0xff] %v185
                %v187 = vld [vmem:[%s167 + $0x88] sm:$0xff]
                %188 = vst [vmem:[%s168 + $0x48] sm:$0xff] %v187
                %v189 = vld [vmem:[%s167 + $0x90] sm:$0xff]
                %190 = vst [vmem:[%s168 + $0x50] sm:$0xff] %v189
                %v191 = vld [vmem:[%s167 + $0x98] sm:$0xff]
                %192 = vst [vmem:[%s168 + $0x58] sm:$0xff] %v191
                %v193 = vld [vmem:[%s167 + $0xc0] sm:$0xff]
                %194 = vst [vmem:[%s168 + $0x60] sm:$0xff] %v193
                %v195 = vld [vmem:[%s167 + $0xc8] sm:$0xff]
                %196 = vst [vmem:[%s168 + $0x68] sm:$0xff] %v195
                %v197 = vld [vmem:[%s167 + $0xd0] sm:$0xff]
                %198 = vst [vmem:[%s168 + $0x70] sm:$0xff] %v197
                %v199 = vld [vmem:[%s167 + $0xd8] sm:$0xff]
                %200 = vst [vmem:[%s168 + $0x78] sm:$0xff] %v199
              $region37: #{tpu_custom_call.1} parent=31 // loop_footer
                %s166 = sadd.s32 1, %s162
              $region38: #{tpu_custom_call.1} parent=31 // loop_footer_branch
                %161 = sbr.rel target = $region34
              $region39: #{tpu_custom_call.1} parent=31 // loop_exit
                _
            $region32: #{tpu_custom_call.1} parent=27 // pred_fallthru
              _
            // Predicated region
            $region40: #{tpu_custom_call.1} parent=27 // pred_check
              _
            $region41: #{tpu_custom_call.1} parent=27 // pred_check_branch
              %202 = sbr.rel target = $region43
            $region42: #{tpu_custom_call.1} parent=27 // pred_region
              _
            $region43: #{tpu_custom_call.1} parent=27 // pred_fallthru
              _
          $region28: #{tpu_custom_call.1} parent=23 // pred_fallthru
            _
          %203 = vnop
        $region24: #{tpu_custom_call.1} parent=19 // pred_fallthru
          _
        // Predicated region
        $region44: #{tpu_custom_call.1} parent=19 // pred_check
          %p204 = pneg %p71
        $region45: #{tpu_custom_call.1} parent=19 // pred_check_branch
          %206 = sbr.rel (%p204) target = $region47
        $region46: #{tpu_custom_call.1} parent=19 // pred_region
          %s207 = sadd.s32 %s16, %s17
          %s208 = smul.u32 4, %s207
          %p209 = scmp.lt.s32.totalorder %s208, 7
          %s210 = scalar_select %p209, %s208, 7
          %s211 = scalar_lea.vmem %s1, %s210
          %s212 = sadd.s32 %s16, %s17
          %s213 = smul.u32 4, %s212
        $region47: #{tpu_custom_call.1} parent=19 // pred_fallthru
          _
      $region20: #{tpu_custom_call.1} parent=5 // pred_fallthru
        _
      %p214 = scmp.le.s32.totalorder 1, %s9
      %p215 = scmp.lt.s32.totalorder %s9, 3
      %p216 = pnand %p214, %p215
      %p217 = pneg %p216
      // Predicated region
      $region48: #{tpu_custom_call.1} parent=5 // pred_check
        _
      $region49: #{tpu_custom_call.1} parent=5 // pred_check_branch
        %219 = sbr.rel (%p216) target = $region51
      $region50: #{tpu_custom_call.1} parent=5 // pred_region
        %s220 = ssub.s32 %s9, 1
        %s221 = sand.u32 %s36, 1
        %s222 = sand.u32 %s36, 1
        %s223 = smul.addr %s222, 128
        %s224 = scalar_lea.vmem [#allocation2], %s223
        // Predicated region
        $region52: #{tpu_custom_call.1} parent=50 // pred_check
          %p225 = pneg %p49
        $region53: #{tpu_custom_call.1} parent=50 // pred_check_branch
          %227 = sbr.rel (%p225) target = $region55
        $region54: #{tpu_custom_call.1} parent=50 // pred_region
          _
        $region55: #{tpu_custom_call.1} parent=50 // pred_fallthru
          _
        %s228 = sand.u32 %s36, 1
        %s229 = sand.u32 %s36, 1
        %s230 = smul.addr %s229, 128
        %s231 = scalar_lea.vmem [#allocation2], %s230
        %p232 = pneg %p49
        %p233 = pneg %p46
        %s234 = sadd.s32 %s18, %s19
        %s235 = smul.u32 4, %s234
        %p236 = scmp.lt.s32.totalorder %s235, 7
        %s237 = scalar_select %p236, %s235, 7
        %s238 = scalar_lea.vmem %s1, %s237
        %p239 = pneg %p77
        %p240 = pneg %p74
        %p241 = pneg %p98
        %p242 = pneg %p95
        %p243 = pneg %p124
        %p244 = pneg %p121
        %p245 = scmp.lt.s32.totalorder %s18, 1
        %s246 = scalar_select %p245, %s18, 1
        %s247 = scalar_lea.vmem %s3, %s246
        %s248 = sadd.s32 %s18, %s19
        %s249 = smul.u32 4, %s248
        %s250 = sadd.s32 %s18, %s19
        %s251 = smul.u32 4, %s250
        %p252 = scmp.lt.s32.totalorder %s251, 7
        %s253 = scalar_select %p252, %s251, 7
        %s254 = scalar_lea.vmem %s1, %s253
        %s255 = sadd.s32 %s18, %s19
        %s256 = smul.u32 4, %s255
        %p257 = scmp.lt.s32.totalorder %s18, 1
        %s258 = scalar_select %p257, %s18, 1
        %s259 = scalar_lea.vmem %s3, %s258
        %p260 = scmp.eq.s32.totalorder %s19, 0
        // Predicated region
        $region56: #{tpu_custom_call.1} parent=50 // pred_check
          %p261 = pneg %p260
        $region57: #{tpu_custom_call.1} parent=50 // pred_check_branch
          %263 = sbr.rel (%p261) target = $region59
        $region58: #{tpu_custom_call.1} parent=50 // pred_region
          %vm264 = vcmask 0
          %265 = vst.msk [vmem:[%s259] sm:$0x1] %vm264, 0.0
        $region59: #{tpu_custom_call.1} parent=50 // pred_fallthru
          _
        %v266 = vld [vmem:[%s224] sm:$0xff]
        %v267 = vld [vmem:[%s224 + $0x8] sm:$0xff]
        %v268 = vld [vmem:[%s224 + $0x10] sm:$0xff]
        %v269 = vld [vmem:[%s224 + $0x18] sm:$0xff]
        %v270 = vld [vmem:[%s224 + $0x20] sm:$0xff]
        %v271 = vld [vmem:[%s224 + $0x28] sm:$0xff]
        %v272 = vld [vmem:[%s224 + $0x30] sm:$0xff]
        %v273 = vld [vmem:[%s224 + $0x38] sm:$0xff]
        %v274 = vld [vmem:[%s224 + $0x40] sm:$0xff]
        %v275 = vld [vmem:[%s224 + $0x48] sm:$0xff]
        %v276 = vld [vmem:[%s224 + $0x50] sm:$0xff]
        %v277 = vld [vmem:[%s224 + $0x58] sm:$0xff]
        %v278 = vld [vmem:[%s224 + $0x60] sm:$0x1]
        %v279 = vld [vmem:[%s224 + $0x68] sm:$0x1]
        %v280 = vld [vmem:[%s224 + $0x70] sm:$0x1]
        %v281 = vld [vmem:[%s224 + $0x78] sm:$0x1]
        %v282 = vld [vmem:[%s254] sm:$0xf]
        %v283 = vlaneseq
        %v284 = vshrl.u32 %v283, 7
        %v285 = vadd.s32 %v284, 8
        %v286 = vadd.s32 %v284, 16
        %v287 = vadd.s32 %v284, 24
        %v288 = vlaneseq
        %v289 = vshrl.u32 %v288, 7
        %v290 = vsub.s32 0, %v289
        %v291 = vrot.slane %v282, %v290
        %v292 = vlaneseq
        %v293 = vshrl.u32 %v292, 7
        %v294 = vsub.s32 1, %v293
        %v295 = vrot.slane %v282, %v294
        %v296 = vlaneseq
        %v297 = vshrl.u32 %v296, 7
        %v298 = vsub.s32 2, %v297
        %v299 = vrot.slane %v282, %v298
        %v300 = vlaneseq
        %v301 = vshrl.u32 %v300, 7
        %v302 = vsub.s32 3, %v301
        %v303 = vrot.slane %v282, %v302
        %vm304 = vcmp.eq.s32.totalorder %v284, %v291
        %vm305 = vcmp.eq.s32.totalorder %v284, %v295
        %vm306 = vcmp.eq.s32.totalorder %v284, %v299
        %vm307 = vcmp.eq.s32.totalorder %v284, %v303
        %vm308 = vcmp.eq.s32.totalorder %v285, %v291
        %vm309 = vcmp.eq.s32.totalorder %v285, %v295
        %vm310 = vcmp.eq.s32.totalorder %v285, %v299
        %vm311 = vcmp.eq.s32.totalorder %v285, %v303
        %vm312 = vcmp.eq.s32.totalorder %v286, %v291
        %vm313 = vcmp.eq.s32.totalorder %v286, %v295
        %vm314 = vcmp.eq.s32.totalorder %v286, %v299
        %vm315 = vcmp.eq.s32.totalorder %v286, %v303
        %vm316 = vcmp.eq.s32.totalorder %v287, %v291
        %vm317 = vcmp.eq.s32.totalorder %v287, %v295
        %vm318 = vcmp.eq.s32.totalorder %v287, %v299
        %vm319 = vcmp.eq.s32.totalorder %v287, %v303
        %v320 = vsel %vm304, %v266, 0.0
        %v321 = vsel %vm305, %v267, 0.0
        %v322 = vsel %vm306, %v268, 0.0
        %v323 = vsel %vm307, %v269, 0.0
        %v324 = vsel %vm308, %v270, 0.0
        %v325 = vsel %vm309, %v271, 0.0
        %v326 = vsel %vm310, %v272, 0.0
        %v327 = vsel %vm311, %v273, 0.0
        %v328 = vsel %vm312, %v274, 0.0
        %v329 = vsel %vm313, %v275, 0.0
        %v330 = vsel %vm314, %v276, 0.0
        %v331 = vsel %vm315, %v277, 0.0
        %v332 = vsel %vm316, %v278, 0.0
        %v333 = vsel %vm317, %v279, 0.0
        %v334 = vsel %vm318, %v280, 0.0
        %v335 = vsel %vm319, %v281, 0.0
        %v336 = vadd.f32 %v320, %v321
        %v337 = vadd.f32 %v336, %v322
        %v338 = vadd.f32 %v337, %v323
        %v339 = vadd.f32 %v338, %v324
        %v340 = vadd.f32 %v339, %v325
        %v341 = vadd.f32 %v340, %v326
        %v342 = vadd.f32 %v341, %v327
        %v343 = vadd.f32 %v342, %v328
        %v344 = vadd.f32 %v343, %v329
        %v345 = vadd.f32 %v344, %v330
        %v346 = vadd.f32 %v345, %v331
        %vm347 = vcmask 1040384
        %v348 = vsel %vm347, %v332, 0.0
        %v349 = vadd.f32 %v346, %v348
        %v350 = vsel %vm347, %v333, 0.0
        %v351 = vadd.f32 %v349, %v350
        %v352 = vsel %vm347, %v334, 0.0
        %v353 = vadd.f32 %v351, %v352
        %v354 = vsel %vm347, %v335, 0.0
        %v355 = vadd.f32 %v353, %v354
        %356 = vadd.xlane.f32.xlu0 %v355
        %v357 = vpop.xlane.xlu0 %356
        %v358 = vrot.slane %v357, 4
        %v359 = vadd.f32 %v357, %v358
        %v360 = vrot.slane %v359, 2
        %v361 = vadd.f32 %v359, %v360
        %v362 = vrot.slane %v361, 1
        %v363 = vadd.f32 %v361, %v362
        %s364 = vtos %v363
        %s365 = ssub.f32 0.0, %s364
        %v366 = vmul.f32 %v266, 1.442695
        %v367 = vpow.pop %v366
        %v368 = vmul.f32 %v267, 1.442695
        %v369 = vpow.pop %v368
        %v370 = vmul.f32 %v268, 1.442695
        %v371 = vpow.pop %v370
        %v372 = vmul.f32 %v269, 1.442695
        %v373 = vpow.pop %v372
        %v374 = vmul.f32 %v270, 1.442695
        %v375 = vpow.pop %v374
        %v376 = vmul.f32 %v271, 1.442695
        %v377 = vpow.pop %v376
        %v378 = vmul.f32 %v272, 1.442695
        %v379 = vpow.pop %v378
        %v380 = vmul.f32 %v273, 1.442695
        %v381 = vpow.pop %v380
        %v382 = vmul.f32 %v274, 1.442695
        %v383 = vpow.pop %v382
        %v384 = vmul.f32 %v275, 1.442695
        %v385 = vpow.pop %v384
        %v386 = vmul.f32 %v276, 1.442695
        %v387 = vpow.pop %v386
        %v388 = vmul.f32 %v277, 1.442695
        %v389 = vpow.pop %v388
        %v390 = vmul.f32 %v278, 1.442695
        %v391 = vpow.pop %v390
        %v392 = vmul.f32 %v279, 1.442695
        %v393 = vpow.pop %v392
        %v394 = vmul.f32 %v280, 1.442695
        %v395 = vpow.pop %v394
        %v396 = vmul.f32 %v281, 1.442695
        %v397 = vpow.pop %v396
        %v398 = vld [vmem:[%s2] sm:$0xff]
        %v399 = vld [vmem:[%s2 + $0x8] sm:$0xff]
        %v400 = vld [vmem:[%s2 + $0x10] sm:$0xff]
        %v401 = vld [vmem:[%s2 + $0x18] sm:$0xff]
        %v402 = vld [vmem:[%s2 + $0x20] sm:$0xff]
        %v403 = vld [vmem:[%s2 + $0x28] sm:$0xff]
        %v404 = vld [vmem:[%s2 + $0x30] sm:$0xff]
        %v405 = vld [vmem:[%s2 + $0x38] sm:$0xff]
        %v406 = vld [vmem:[%s2 + $0x40] sm:$0xff]
        %v407 = vld [vmem:[%s2 + $0x48] sm:$0xff]
        %v408 = vld [vmem:[%s2 + $0x50] sm:$0xff]
        %v409 = vld [vmem:[%s2 + $0x58] sm:$0xff]
        %v410 = vld [vmem:[%s2 + $0x60] sm:$0xff]
        %v411 = vld [vmem:[%s2 + $0x68] sm:$0xff]
        %v412 = vld [vmem:[%s2 + $0x70] sm:$0xff]
        %v413 = vld [vmem:[%s2 + $0x78] sm:$0xff]
        %v414 = vld [vmem:[%s2 + $0x80] sm:$0xff]
        %v415 = vld [vmem:[%s2 + $0x88] sm:$0xff]
        %v416 = vld [vmem:[%s2 + $0x90] sm:$0xff]
        %v417 = vld [vmem:[%s2 + $0x98] sm:$0xff]
        %v418 = vld [vmem:[%s2 + $0xa0] sm:$0xff]
        %v419 = vld [vmem:[%s2 + $0xa8] sm:$0xff]
        %v420 = vld [vmem:[%s2 + $0xb0] sm:$0xff]
        %v421 = vld [vmem:[%s2 + $0xb8] sm:$0xff]
        %v422 = vld [vmem:[%s2 + $0xc0] sm:$0xff]
        %v423 = vld [vmem:[%s2 + $0xc8] sm:$0xff]
        %v424 = vld [vmem:[%s2 + $0xd0] sm:$0xff]
        %v425 = vld [vmem:[%s2 + $0xd8] sm:$0xff]
        %v426 = vld [vmem:[%s2 + $0xe0] sm:$0xff]
        %v427 = vld [vmem:[%s2 + $0xe8] sm:$0xff]
        %v428 = vld [vmem:[%s2 + $0xf0] sm:$0xff]
        %v429 = vld [vmem:[%s2 + $0xf8] sm:$0xff]
        %vm430 = vcmask 203776
        %v432 = vsel %vm430, %v398, 0
        %v435 = vsel %vm430, %v399, 0
        %v438 = vsel %vm430, %v400, 0
        %v441 = vsel %vm430, %v401, 0
        %v444 = vsel %vm430, %v402, 0
        %v447 = vsel %vm430, %v403, 0
        %v450 = vsel %vm430, %v404, 0
        %v453 = vsel %vm430, %v405, 0
        %v456 = vsel %vm430, %v406, 0
        %v459 = vsel %vm430, %v407, 0
        %v462 = vsel %vm430, %v408, 0
        %v465 = vsel %vm430, %v409, 0
        %v468 = vsel %vm430, %v410, 0
        %v471 = vsel %vm430, %v411, 0
        %v474 = vsel %vm430, %v412, 0
        %v477 = vsel %vm430, %v413, 0
        %v480 = vsel %vm430, %v414, 0
        %v483 = vsel %vm430, %v415, 0
        %v486 = vsel %vm430, %v416, 0
        %v489 = vsel %vm430, %v417, 0
        %v492 = vsel %vm430, %v418, 0
        %v495 = vsel %vm430, %v419, 0
        %v498 = vsel %vm430, %v420, 0
        %v501 = vsel %vm430, %v421, 0
        %v504 = vsel %vm430, %v422, 0
        %v507 = vsel %vm430, %v423, 0
        %v510 = vsel %vm430, %v424, 0
        %v513 = vsel %vm430, %v425, 0
        %v516 = vsel %vm430, %v426, 0
        %v519 = vsel %vm430, %v427, 0
        %v522 = vsel %vm430, %v428, 0
        %v525 = vsel %vm430, %v429, 0
        %v528 = vsel %vm347, %v391, 0
        %v531 = vsel %vm347, %v393, 0
        %v534 = vsel %vm347, %v395, 0
        %v537 = vsel %vm347, %v397, 0
        %539 = vmatprep.subr.mxu0 %v369
        %540 = vmatpush1.msra.mxu0 %v367
        %541 = vmatprep.subr.mxu0 %v377
        %542 = vmatpush1.msra.mxu0 %v375
        %543 = vmatprep.subr.mxu0 %v385
        %544 = vmatpush1.msra.mxu0 %v383
        %545 = vmatprep.subr.mxu0 %v531
        %546 = vmatpush1.msra.mxu0 %v528
        %547 = vmatprep.subr.mxu0 0.0
        %548 = vmatpush1.msra.mxu0 0.0
        %549 = vmatprep.subr.mxu0 0.0
        %550 = vmatpush1.msra.mxu0 0.0
        %551 = vmatprep.subr.mxu0 0.0
        %552 = vmatpush1.msra.mxu0 0.0
        %553 = vmatprep.subr.mxu0 0.0
        %554 = vmatpush1.msra.mxu0 0.0
        %555 = vmatprep.subr.mxu0 0.0
        %556 = vmatpush1.msra.mxu0 0.0
        %557 = vmatprep.subr.mxu0 0.0
        %558 = vmatpush1.msra.mxu0 0.0
        %559 = vmatprep.subr.mxu0 0.0
        %560 = vmatpush1.msra.mxu0 0.0
        %561 = vmatprep.subr.mxu0 0.0
        %562 = vmatpush1.msra.mxu0 0.0
        %563 = vmatprep.subr.mxu0 0.0
        %564 = vmatpush1.msra.mxu0 0.0
        %565 = vmatprep.subr.mxu0 0.0
        %566 = vmatpush1.msra.mxu0 0.0
        %567 = vmatprep.subr.mxu0 0.0
        %568 = vmatpush1.msra.mxu0 0.0
        %569 = vmatprep.subr.mxu0 0.0
        %570 = vmatpush1.msra.mxu0 0.0
        %571 = vmatprep.subr.mxu0 0.0
        %572 = vmatpush1.msra.mxu0 0.0
        %573 = vmatprep.subr.mxu0 0.0
        %574 = vmatpush1.msra.mxu0 0.0
        %575 = vmatprep.subr.mxu0 0.0
        %576 = vmatpush1.msra.mxu0 0.0
        %577 = vmatprep.subr.mxu0 0.0
        %578 = vmatpush1.msra.mxu0 0.0
        %579 = vmatprep.subr.mxu0 0.0
        %580 = vmatpush1.msra.mxu0 0.0
        %581 = vmatprep.subr.mxu0 0.0
        %582 = vmatpush1.msra.mxu0 0.0
        %583 = vmatprep.subr.mxu0 0.0
        %584 = vmatpush1.msra.mxu0 0.0
        %585 = vmatprep.subr.mxu0 0.0
        %586 = vmatpush1.msra.mxu0 0.0
        %587 = vmatprep.subr.mxu0 0.0
        %588 = vmatpush1.msra.mxu0 0.0
        %589 = vmatprep.subr.mxu0 0.0
        %590 = vmatpush1.msra.mxu0 0.0
        %591 = vmatprep.subr.mxu0 0.0
        %592 = vmatpush1.msra.mxu0 0.0
        %593 = vmatprep.subr.mxu0 0.0
        %594 = vmatpush1.msra.mxu0 0.0
        %595 = vmatprep.subr.mxu0 0.0
        %596 = vmatpush1.msra.mxu0 0.0
        %597 = vmatprep.subr.mxu0 0.0
        %598 = vmatpush1.msra.mxu0 0.0
        %599 = vmatprep.subr.mxu0 0.0
        %600 = vmatpush1.msra.mxu0 0.0
        %601 = vmatprep.subr.mxu0 0.0
        %602 = vmatpush1.msra.mxu0 0.0
        %603 = vmatprep.mubr.f32.mxu0 0.0
        %604 = vmatmul.mubr.f32.gmra.mrb[0].mxu0 %v432
        %v605 = vpop.f32.mrb[0].mxu0
        %v606 = vadd.f32 0.0, %v605
        %v607 = vpop.f32.mrb[0].mxu0
        %v608 = vadd.f32 0.0, %v607
        %609 = vmatprep.mubr.f32.mxu0 0.0
        %610 = vmatmul.mubr.f32.gmra.mrb[0].mxu0 %v435
        %v611 = vpop.f32.mrb[0].mxu0
        %v612 = vadd.f32 0.0, %v611
        %v613 = vpop.f32.mrb[0].mxu0
        %v614 = vadd.f32 0.0, %v613
        %615 = vmatprep.mubr.f32.mxu0 0.0
        %616 = vmatmul.mubr.f32.gmra.mrb[0].mxu0 %v438
        %v617 = vpop.f32.mrb[0].mxu0
        %v618 = vadd.f32 0.0, %v617
        %v619 = vpop.f32.mrb[0].mxu0
        %v620 = vadd.f32 0.0, %v619
        %621 = vmatprep.mubr.f32.mxu0 0.0
        %622 = vmatmul.mubr.f32.gmra.mrb[0].mxu0 %v441
        %v623 = vpop.f32.mrb[0].mxu0
        %v624 = vadd.f32 0.0, %v623
        %v625 = vpop.f32.mrb[0].mxu0
        %v626 = vadd.f32 0.0, %v625
        %627 = vmatprep.mubr.f32.mxu0 0.0
        %628 = vmatmul.mubr.f32.gmra.mrb[0].mxu0 %v444
        %v629 = vpop.f32.mrb[0].mxu0
        %v630 = vadd.f32 0.0, %v629
        %v631 = vpop.f32.mrb[0].mxu0
        %v632 = vadd.f32 0.0, %v631
        %633 = vmatprep.mubr.f32.mxu0 0.0
        %634 = vmatmul.mubr.f32.gmra.mrb[0].mxu0 %v447
        %v635 = vpop.f32.mrb[0].mxu0
        %v636 = vadd.f32 0.0, %v635
        %v637 = vpop.f32.mrb[0].mxu0
        %v638 = vadd.f32 0.0, %v637
        %639 = vmatprep.mubr.f32.mxu0 0.0
        %640 = vmatmul.mubr.f32.gmra.mrb[0].mxu0 %v450
        %v641 = vpop.f32.mrb[0].mxu0
        %v642 = vadd.f32 0.0, %v641
        %v643 = vpop.f32.mrb[0].mxu0
        %v644 = vadd.f32 0.0, %v643
        %645 = vmatprep.mubr.f32.mxu0 0.0
        %646 = vmatmul.mubr.f32.gmra.mrb[0].mxu0 %v453
        %v647 = vpop.f32.mrb[0].mxu0
        %v648 = vadd.f32 0.0, %v647
        %v649 = vpop.f32.mrb[0].mxu0
        %v650 = vadd.f32 0.0, %v649
        %651 = vmatprep.mubr.f32.mxu0 0.0
        %652 = vmatmul.mubr.f32.gmra.mrb[0].mxu0 %v456
        %v653 = vpop.f32.mrb[0].mxu0
        %v654 = vadd.f32 0.0, %v653
        %v655 = vpop.f32.mrb[0].mxu0
        %v656 = vadd.f32 0.0, %v655
        %657 = vmatprep.mubr.f32.mxu0 0.0
        %658 = vmatmul.mubr.f32.gmra.mrb[0].mxu0 %v459
        %v659 = vpop.f32.mrb[0].mxu0
        %v660 = vadd.f32 0.0, %v659
        %v661 = vpop.f32.mrb[0].mxu0
        %v662 = vadd.f32 0.0, %v661
        %663 = vmatprep.mubr.f32.mxu0 0.0
        %664 = vmatmul.mubr.f32.gmra.mrb[0].mxu0 %v462
        %v665 = vpop.f32.mrb[0].mxu0
        %v666 = vadd.f32 0.0, %v665
        %v667 = vpop.f32.mrb[0].mxu0
        %v668 = vadd.f32 0.0, %v667
        %669 = vmatprep.mubr.f32.mxu0 0.0
        %670 = vmatmul.mubr.f32.gmra.mrb[0].mxu0 %v465
        %v671 = vpop.f32.mrb[0].mxu0
        %v672 = vadd.f32 0.0, %v671
        %v673 = vpop.f32.mrb[0].mxu0
        %v674 = vadd.f32 0.0, %v673
        %675 = vmatprep.mubr.f32.mxu0 0.0
        %676 = vmatmul.mubr.f32.gmra.mrb[0].mxu0 %v468
        %v677 = vpop.f32.mrb[0].mxu0
        %v678 = vadd.f32 0.0, %v677
        %v679 = vpop.f32.mrb[0].mxu0
        %v680 = vadd.f32 0.0, %v679
        %681 = vmatprep.mubr.f32.mxu0 0.0
        %682 = vmatmul.mubr.f32.gmra.mrb[0].mxu0 %v471
        %v683 = vpop.f32.mrb[0].mxu0
        %v684 = vadd.f32 0.0, %v683
        %v685 = vpop.f32.mrb[0].mxu0
        %v686 = vadd.f32 0.0, %v685
        %687 = vmatprep.mubr.f32.mxu0 0.0
        %688 = vmatmul.mubr.f32.gmra.mrb[0].mxu0 %v474
        %v689 = vpop.f32.mrb[0].mxu0
        %v690 = vadd.f32 0.0, %v689
        %v691 = vpop.f32.mrb[0].mxu0
        %v692 = vadd.f32 0.0, %v691
        %693 = vmatprep.mubr.f32.mxu0 0.0
        %694 = vmatmul.mubr.f32.gmra.mrb[0].mxu0 %v477
        %v695 = vpop.f32.mrb[0].mxu0
        %v696 = vadd.f32 0.0, %v695
        %v697 = vpop.f32.mrb[0].mxu0
        %v698 = vadd.f32 0.0, %v697
        %699 = vmatprep.mubr.f32.mxu0 0.0
        %700 = vmatmul.mubr.f32.gmra.mrb[0].mxu0 %v480
        %v701 = vpop.f32.mrb[0].mxu0
        %v702 = vadd.f32 0.0, %v701
        %v703 = vpop.f32.mrb[0].mxu0
        %v704 = vadd.f32 0.0, %v703
        %705 = vmatprep.mubr.f32.mxu0 0.0
        %706 = vmatmul.mubr.f32.gmra.mrb[0].mxu0 %v483
        %v707 = vpop.f32.mrb[0].mxu0
        %v708 = vadd.f32 0.0, %v707
        %v709 = vpop.f32.mrb[0].mxu0
        %v710 = vadd.f32 0.0, %v709
        %711 = vmatprep.mubr.f32.mxu0 0.0
        %712 = vmatmul.mubr.f32.gmra.mrb[0].mxu0 %v486
        %v713 = vpop.f32.mrb[0].mxu0
        %v714 = vadd.f32 0.0, %v713
        %v715 = vpop.f32.mrb[0].mxu0
        %v716 = vadd.f32 0.0, %v715
        %717 = vmatprep.mubr.f32.mxu0 0.0
        %718 = vmatmul.mubr.f32.gmra.mrb[0].mxu0 %v489
        %v719 = vpop.f32.mrb[0].mxu0
        %v720 = vadd.f32 0.0, %v719
        %v721 = vpop.f32.mrb[0].mxu0
        %v722 = vadd.f32 0.0, %v721
        %723 = vmatprep.mubr.f32.mxu0 0.0
        %724 = vmatmul.mubr.f32.gmra.mrb[0].mxu0 %v492
        %v725 = vpop.f32.mrb[0].mxu0
        %v726 = vadd.f32 0.0, %v725
        %v727 = vpop.f32.mrb[0].mxu0
        %v728 = vadd.f32 0.0, %v727
        %729 = vmatprep.mubr.f32.mxu0 0.0
        %730 = vmatmul.mubr.f32.gmra.mrb[0].mxu0 %v495
        %v731 = vpop.f32.mrb[0].mxu0
        %v732 = vadd.f32 0.0, %v731
        %v733 = vpop.f32.mrb[0].mxu0
        %v734 = vadd.f32 0.0, %v733
        %735 = vmatprep.mubr.f32.mxu0 0.0
        %736 = vmatmul.mubr.f32.gmra.mrb[0].mxu0 %v498
        %v737 = vpop.f32.mrb[0].mxu0
        %v738 = vadd.f32 0.0, %v737
        %v739 = vpop.f32.mrb[0].mxu0
        %v740 = vadd.f32 0.0, %v739
        %741 = vmatprep.mubr.f32.mxu0 0.0
        %742 = vmatmul.mubr.f32.gmra.mrb[0].mxu0 %v501
        %v743 = vpop.f32.mrb[0].mxu0
        %v744 = vadd.f32 0.0, %v743
        %v745 = vpop.f32.mrb[0].mxu0
        %v746 = vadd.f32 0.0, %v745
        %747 = vmatprep.mubr.f32.mxu0 0.0
        %748 = vmatmul.mubr.f32.gmra.mrb[0].mxu0 %v504
        %v749 = vpop.f32.mrb[0].mxu0
        %v750 = vadd.f32 0.0, %v749
        %v751 = vpop.f32.mrb[0].mxu0
        %v752 = vadd.f32 0.0, %v751
        %753 = vmatprep.mubr.f32.mxu0 0.0
        %754 = vmatmul.mubr.f32.gmra.mrb[0].mxu0 %v507
        %v755 = vpop.f32.mrb[0].mxu0
        %v756 = vadd.f32 0.0, %v755
        %v757 = vpop.f32.mrb[0].mxu0
        %v758 = vadd.f32 0.0, %v757
        %759 = vmatprep.mubr.f32.mxu0 0.0
        %760 = vmatmul.mubr.f32.gmra.mrb[0].mxu0 %v510
        %v761 = vpop.f32.mrb[0].mxu0
        %v762 = vadd.f32 0.0, %v761
        %v763 = vpop.f32.mrb[0].mxu0
        %v764 = vadd.f32 0.0, %v763
        %765 = vmatprep.mubr.f32.mxu0 0.0
        %766 = vmatmul.mubr.f32.gmra.mrb[0].mxu0 %v513
        %v767 = vpop.f32.mrb[0].mxu0
        %v768 = vadd.f32 0.0, %v767
        %v769 = vpop.f32.mrb[0].mxu0
        %v770 = vadd.f32 0.0, %v769
        %771 = vmatprep.mubr.f32.mxu0 0.0
        %772 = vmatmul.mubr.f32.gmra.mrb[0].mxu0 %v516
        %v773 = vpop.f32.mrb[0].mxu0
        %v774 = vadd.f32 0.0, %v773
        %v775 = vpop.f32.mrb[0].mxu0
        %v776 = vadd.f32 0.0, %v775
        %777 = vmatprep.mubr.f32.mxu0 0.0
        %778 = vmatmul.mubr.f32.gmra.mrb[0].mxu0 %v519
        %v779 = vpop.f32.mrb[0].mxu0
        %v780 = vadd.f32 0.0, %v779
        %v781 = vpop.f32.mrb[0].mxu0
        %v782 = vadd.f32 0.0, %v781
        %783 = vmatprep.mubr.f32.mxu0 0.0
        %784 = vmatmul.mubr.f32.gmra.mrb[0].mxu0 %v522
        %v785 = vpop.f32.mrb[0].mxu0
        %v786 = vadd.f32 0.0, %v785
        %v787 = vpop.f32.mrb[0].mxu0
        %v788 = vadd.f32 0.0, %v787
        %789 = vmatprep.mubr.f32.mxu0 0.0
        %790 = vmatmul.mubr.f32.gmra.mrb[0].mxu0 %v525
        %v791 = vpop.f32.mrb[0].mxu0
        %v792 = vadd.f32 0.0, %v791
        %v793 = vpop.f32.mrb[0].mxu0
        %v794 = vadd.f32 0.0, %v793
        %795 = vdwg.mxu0
        %796 = vmatprep.subr.mxu0 %v373
        %797 = vmatpush1.msra.mxu0 %v371
        %798 = vmatprep.subr.mxu0 %v381
        %799 = vmatpush1.msra.mxu0 %v379
        %800 = vmatprep.subr.mxu0 %v389
        %801 = vmatpush1.msra.mxu0 %v387
        %802 = vmatprep.subr.mxu0 %v537
        %803 = vmatpush1.msra.mxu0 %v534
        %804 = vmatprep.subr.mxu0 0.0
        %805 = vmatpush1.msra.mxu0 0.0
        %806 = vmatprep.subr.mxu0 0.0
        %807 = vmatpush1.msra.mxu0 0.0
        %808 = vmatprep.subr.mxu0 0.0
        %809 = vmatpush1.msra.mxu0 0.0
        %810 = vmatprep.subr.mxu0 0.0
        %811 = vmatpush1.msra.mxu0 0.0
        %812 = vmatprep.subr.mxu0 0.0
        %813 = vmatpush1.msra.mxu0 0.0
        %814 = vmatprep.subr.mxu0 0.0
        %815 = vmatpush1.msra.mxu0 0.0
        %816 = vmatprep.subr.mxu0 0.0
        %817 = vmatpush1.msra.mxu0 0.0
        %818 = vmatprep.subr.mxu0 0.0
        %819 = vmatpush1.msra.mxu0 0.0
        %820 = vmatprep.subr.mxu0 0.0
        %821 = vmatpush1.msra.mxu0 0.0
        %822 = vmatprep.subr.mxu0 0.0
        %823 = vmatpush1.msra.mxu0 0.0
        %824 = vmatprep.subr.mxu0 0.0
        %825 = vmatpush1.msra.mxu0 0.0
        %826 = vmatprep.subr.mxu0 0.0
        %827 = vmatpush1.msra.mxu0 0.0
        %828 = vmatprep.subr.mxu0 0.0
        %829 = vmatpush1.msra.mxu0 0.0
        %830 = vmatprep.subr.mxu0 0.0
        %831 = vmatpush1.msra.mxu0 0.0
        %832 = vmatprep.subr.mxu0 0.0
        %833 = vmatpush1.msra.mxu0 0.0
        %834 = vmatprep.subr.mxu0 0.0
        %835 = vmatpush1.msra.mxu0 0.0
        %836 = vmatprep.subr.mxu0 0.0
        %837 = vmatpush1.msra.mxu0 0.0
        %838 = vmatprep.subr.mxu0 0.0
        %839 = vmatpush1.msra.mxu0 0.0
        %840 = vmatprep.subr.mxu0 0.0
        %841 = vmatpush1.msra.mxu0 0.0
        %842 = vmatprep.subr.mxu0 0.0
        %843 = vmatpush1.msra.mxu0 0.0
        %844 = vmatprep.subr.mxu0 0.0
        %845 = vmatpush1.msra.mxu0 0.0
        %846 = vmatprep.subr.mxu0 0.0
        %847 = vmatpush1.msra.mxu0 0.0
        %848 = vmatprep.subr.mxu0 0.0
        %849 = vmatpush1.msra.mxu0 0.0
        %850 = vmatprep.subr.mxu0 0.0
        %851 = vmatpush1.msra.mxu0 0.0
        %852 = vmatprep.subr.mxu0 0.0
        %853 = vmatpush1.msra.mxu0 0.0
        %854 = vmatprep.subr.mxu0 0.0
        %855 = vmatpush1.msra.mxu0 0.0
        %856 = vmatprep.subr.mxu0 0.0
        %857 = vmatpush1.msra.mxu0 0.0
        %858 = vmatprep.subr.mxu0 0.0
        %859 = vmatpush1.msra.mxu0 0.0
        %860 = vmatprep.mubr.f32.mxu0 0.0
        %861 = vmatmul.mubr.f32.gmra.mrb[0].mxu0 %v432
        %v862 = vpop.f32.mrb[0].mxu0
        %v863 = vadd.f32 0.0, %v862
        %v864 = vpop.f32.mrb[0].mxu0
        %v865 = vadd.f32 0.0, %v864
        %866 = vmatprep.mubr.f32.mxu0 0.0
        %867 = vmatmul.mubr.f32.gmra.mrb[0].mxu0 %v435
        %v868 = vpop.f32.mrb[0].mxu0
        %v869 = vadd.f32 0.0, %v868
        %v870 = vpop.f32.mrb[0].mxu0
        %v871 = vadd.f32 0.0, %v870
        %872 = vmatprep.mubr.f32.mxu0 0.0
        %873 = vmatmul.mubr.f32.gmra.mrb[0].mxu0 %v438
        %v874 = vpop.f32.mrb[0].mxu0
        %v875 = vadd.f32 0.0, %v874
        %v876 = vpop.f32.mrb[0].mxu0
        %v877 = vadd.f32 0.0, %v876
        %878 = vmatprep.mubr.f32.mxu0 0.0
        %879 = vmatmul.mubr.f32.gmra.mrb[0].mxu0 %v441
        %v880 = vpop.f32.mrb[0].mxu0
        %v881 = vadd.f32 0.0, %v880
        %v882 = vpop.f32.mrb[0].mxu0
        %v883 = vadd.f32 0.0, %v882
        %884 = vmatprep.mubr.f32.mxu0 0.0
        %885 = vmatmul.mubr.f32.gmra.mrb[0].mxu0 %v444
        %v886 = vpop.f32.mrb[0].mxu0
        %v887 = vadd.f32 0.0, %v886
        %v888 = vpop.f32.mrb[0].mxu0
        %v889 = vadd.f32 0.0, %v888
        %890 = vmatprep.mubr.f32.mxu0 0.0
        %891 = vmatmul.mubr.f32.gmra.mrb[0].mxu0 %v447
        %v892 = vpop.f32.mrb[0].mxu0
        %v893 = vadd.f32 0.0, %v892
        %v894 = vpop.f32.mrb[0].mxu0
        %v895 = vadd.f32 0.0, %v894
        %896 = vmatprep.mubr.f32.mxu0 0.0
        %897 = vmatmul.mubr.f32.gmra.mrb[0].mxu0 %v450
        %v898 = vpop.f32.mrb[0].mxu0
        %v899 = vadd.f32 0.0, %v898
        %v900 = vpop.f32.mrb[0].mxu0
        %v901 = vadd.f32 0.0, %v900
        %902 = vmatprep.mubr.f32.mxu0 0.0
        %903 = vmatmul.mubr.f32.gmra.mrb[0].mxu0 %v453
        %v904 = vpop.f32.mrb[0].mxu0
        %v905 = vadd.f32 0.0, %v904
        %v906 = vpop.f32.mrb[0].mxu0
        %v907 = vadd.f32 0.0, %v906
        %908 = vmatprep.mubr.f32.mxu0 0.0
        %909 = vmatmul.mubr.f32.gmra.mrb[0].mxu0 %v456
        %v910 = vpop.f32.mrb[0].mxu0
        %v911 = vadd.f32 0.0, %v910
        %v912 = vpop.f32.mrb[0].mxu0
        %v913 = vadd.f32 0.0, %v912
        %914 = vmatprep.mubr.f32.mxu0 0.0
        %915 = vmatmul.mubr.f32.gmra.mrb[0].mxu0 %v459
        %v916 = vpop.f32.mrb[0].mxu0
        %v917 = vadd.f32 0.0, %v916
        %v918 = vpop.f32.mrb[0].mxu0
        %v919 = vadd.f32 0.0, %v918
        %920 = vmatprep.mubr.f32.mxu0 0.0
        %921 = vmatmul.mubr.f32.gmra.mrb[0].mxu0 %v462
        %v922 = vpop.f32.mrb[0].mxu0
        %v923 = vadd.f32 0.0, %v922
        %v924 = vpop.f32.mrb[0].mxu0
        %v925 = vadd.f32 0.0, %v924
        %926 = vmatprep.mubr.f32.mxu0 0.0
        %927 = vmatmul.mubr.f32.gmra.mrb[0].mxu0 %v465
        %v928 = vpop.f32.mrb[0].mxu0
        %v929 = vadd.f32 0.0, %v928
        %v930 = vpop.f32.mrb[0].mxu0
        %v931 = vadd.f32 0.0, %v930
        %932 = vmatprep.mubr.f32.mxu0 0.0
        %933 = vmatmul.mubr.f32.gmra.mrb[0].mxu0 %v468
        %v934 = vpop.f32.mrb[0].mxu0
        %v935 = vadd.f32 0.0, %v934
        %v936 = vpop.f32.mrb[0].mxu0
        %v937 = vadd.f32 0.0, %v936
        %938 = vmatprep.mubr.f32.mxu0 0.0
        %939 = vmatmul.mubr.f32.gmra.mrb[0].mxu0 %v471
        %v940 = vpop.f32.mrb[0].mxu0
        %v941 = vadd.f32 0.0, %v940
        %v942 = vpop.f32.mrb[0].mxu0
        %v943 = vadd.f32 0.0, %v942
        %944 = vmatprep.mubr.f32.mxu0 0.0
        %945 = vmatmul.mubr.f32.gmra.mrb[0].mxu0 %v474
        %v946 = vpop.f32.mrb[0].mxu0
        %v947 = vadd.f32 0.0, %v946
        %v948 = vpop.f32.mrb[0].mxu0
        %v949 = vadd.f32 0.0, %v948
        %950 = vmatprep.mubr.f32.mxu0 0.0
        %951 = vmatmul.mubr.f32.gmra.mrb[0].mxu0 %v477
        %v952 = vpop.f32.mrb[0].mxu0
        %v953 = vadd.f32 0.0, %v952
        %v954 = vpop.f32.mrb[0].mxu0
        %v955 = vadd.f32 0.0, %v954
        %956 = vmatprep.mubr.f32.mxu0 0.0
        %957 = vmatmul.mubr.f32.gmra.mrb[0].mxu0 %v480
        %v958 = vpop.f32.mrb[0].mxu0
        %v959 = vadd.f32 0.0, %v958
        %v960 = vpop.f32.mrb[0].mxu0
        %v961 = vadd.f32 0.0, %v960
        %962 = vmatprep.mubr.f32.mxu0 0.0
        %963 = vmatmul.mubr.f32.gmra.mrb[0].mxu0 %v483
        %v964 = vpop.f32.mrb[0].mxu0
        %v965 = vadd.f32 0.0, %v964
        %v966 = vpop.f32.mrb[0].mxu0
        %v967 = vadd.f32 0.0, %v966
        %968 = vmatprep.mubr.f32.mxu0 0.0
        %969 = vmatmul.mubr.f32.gmra.mrb[0].mxu0 %v486
        %v970 = vpop.f32.mrb[0].mxu0
        %v971 = vadd.f32 0.0, %v970
        %v972 = vpop.f32.mrb[0].mxu0
        %v973 = vadd.f32 0.0, %v972
        %974 = vmatprep.mubr.f32.mxu0 0.0
        %975 = vmatmul.mubr.f32.gmra.mrb[0].mxu0 %v489
        %v976 = vpop.f32.mrb[0].mxu0
        %v977 = vadd.f32 0.0, %v976
        %v978 = vpop.f32.mrb[0].mxu0
        %v979 = vadd.f32 0.0, %v978
        %980 = vmatprep.mubr.f32.mxu0 0.0
        %981 = vmatmul.mubr.f32.gmra.mrb[0].mxu0 %v492
        %v982 = vpop.f32.mrb[0].mxu0
        %v983 = vadd.f32 0.0, %v982
        %v984 = vpop.f32.mrb[0].mxu0
        %v985 = vadd.f32 0.0, %v984
        %986 = vmatprep.mubr.f32.mxu0 0.0
        %987 = vmatmul.mubr.f32.gmra.mrb[0].mxu0 %v495
        %v988 = vpop.f32.mrb[0].mxu0
        %v989 = vadd.f32 0.0, %v988
        %v990 = vpop.f32.mrb[0].mxu0
        %v991 = vadd.f32 0.0, %v990
        %992 = vmatprep.mubr.f32.mxu0 0.0
        %993 = vmatmul.mubr.f32.gmra.mrb[0].mxu0 %v498
        %v994 = vpop.f32.mrb[0].mxu0
        %v995 = vadd.f32 0.0, %v994
        %v996 = vpop.f32.mrb[0].mxu0
        %v997 = vadd.f32 0.0, %v996
        %998 = vmatprep.mubr.f32.mxu0 0.0
        %999 = vmatmul.mubr.f32.gmra.mrb[0].mxu0 %v501
        %v1000 = vpop.f32.mrb[0].mxu0
        %v1001 = vadd.f32 0.0, %v1000
        %v1002 = vpop.f32.mrb[0].mxu0
        %v1003 = vadd.f32 0.0, %v1002
        %1004 = vmatprep.mubr.f32.mxu0 0.0
        %1005 = vmatmul.mubr.f32.gmra.mrb[0].mxu0 %v504
        %v1006 = vpop.f32.mrb[0].mxu0
        %v1007 = vadd.f32 0.0, %v1006
        %v1008 = vpop.f32.mrb[0].mxu0
        %v1009 = vadd.f32 0.0, %v1008
        %1010 = vmatprep.mubr.f32.mxu0 0.0
        %1011 = vmatmul.mubr.f32.gmra.mrb[0].mxu0 %v507
        %v1012 = vpop.f32.mrb[0].mxu0
        %v1013 = vadd.f32 0.0, %v1012
        %v1014 = vpop.f32.mrb[0].mxu0
        %v1015 = vadd.f32 0.0, %v1014
        %1016 = vmatprep.mubr.f32.mxu0 0.0
        %1017 = vmatmul.mubr.f32.gmra.mrb[0].mxu0 %v510
        %v1018 = vpop.f32.mrb[0].mxu0
        %v1019 = vadd.f32 0.0, %v1018
        %v1020 = vpop.f32.mrb[0].mxu0
        %v1021 = vadd.f32 0.0, %v1020
        %1022 = vmatprep.mubr.f32.mxu0 0.0
        %1023 = vmatmul.mubr.f32.gmra.mrb[0].mxu0 %v513
        %v1024 = vpop.f32.mrb[0].mxu0
        %v1025 = vadd.f32 0.0, %v1024
        %v1026 = vpop.f32.mrb[0].mxu0
        %v1027 = vadd.f32 0.0, %v1026
        %1028 = vmatprep.mubr.f32.mxu0 0.0
        %1029 = vmatmul.mubr.f32.gmra.mrb[0].mxu0 %v516
        %v1030 = vpop.f32.mrb[0].mxu0
        %v1031 = vadd.f32 0.0, %v1030
        %v1032 = vpop.f32.mrb[0].mxu0
        %v1033 = vadd.f32 0.0, %v1032
        %1034 = vmatprep.mubr.f32.mxu0 0.0
        %1035 = vmatmul.mubr.f32.gmra.mrb[0].mxu0 %v519
        %v1036 = vpop.f32.mrb[0].mxu0
        %v1037 = vadd.f32 0.0, %v1036
        %v1038 = vpop.f32.mrb[0].mxu0
        %v1039 = vadd.f32 0.0, %v1038
        %1040 = vmatprep.mubr.f32.mxu0 0.0
        %1041 = vmatmul.mubr.f32.gmra.mrb[0].mxu0 %v522
        %v1042 = vpop.f32.mrb[0].mxu0
        %v1043 = vadd.f32 0.0, %v1042
        %v1044 = vpop.f32.mrb[0].mxu0
        %v1045 = vadd.f32 0.0, %v1044
        %1046 = vmatprep.mubr.f32.mxu0 0.0
        %1047 = vmatmul.mubr.f32.gmra.mrb[0].mxu0 %v525
        %v1048 = vpop.f32.mrb[0].mxu0
        %v1049 = vadd.f32 0.0, %v1048
        %v1050 = vpop.f32.mrb[0].mxu0
        %v1051 = vadd.f32 0.0, %v1050
        %1052 = vdwg.mxu0
        %v1053 = vsub.f32 1.0, %v702
        %v1054 = vsub.f32 1.0, %v704
        %v1055 = vsub.f32 1.0, %v959
        %v1056 = vsub.f32 1.0, %v961
        %v1057 = vsub.f32 1.0, %v708
        %v1058 = vsub.f32 1.0, %v710
        %v1059 = vsub.f32 1.0, %v965
        %v1060 = vsub.f32 1.0, %v967
        %v1061 = vsub.f32 1.0, %v714
        %v1062 = vsub.f32 1.0, %v716
        %v1063 = vsub.f32 1.0, %v971
        %v1064 = vsub.f32 1.0, %v973
        %v1065 = vsub.f32 1.0, %v720
        %v1066 = vsub.f32 1.0, %v722
        %v1067 = vsub.f32 1.0, %v977
        %v1068 = vsub.f32 1.0, %v979
        %v1069 = vsub.f32 1.0, %v726
        %v1070 = vsub.f32 1.0, %v728
        %v1071 = vsub.f32 1.0, %v983
        %v1072 = vsub.f32 1.0, %v985
        %v1073 = vsub.f32 1.0, %v732
        %v1074 = vsub.f32 1.0, %v734
        %v1075 = vsub.f32 1.0, %v989
        %v1076 = vsub.f32 1.0, %v991
        %v1077 = vsub.f32 1.0, %v738
        %v1078 = vsub.f32 1.0, %v740
        %v1079 = vsub.f32 1.0, %v995
        %v1080 = vsub.f32 1.0, %v997
        %v1081 = vsub.f32 1.0, %v744
        %v1082 = vsub.f32 1.0, %v746
        %v1083 = vsub.f32 1.0, %v1001
        %v1084 = vsub.f32 1.0, %v1003
        %v1085 = vsub.f32 1.0, %v750
        %v1086 = vsub.f32 1.0, %v752
        %v1087 = vsub.f32 1.0, %v1007
        %v1088 = vsub.f32 1.0, %v1009
        %v1089 = vsub.f32 1.0, %v756
        %v1090 = vsub.f32 1.0, %v758
        %v1091 = vsub.f32 1.0, %v1013
        %v1092 = vsub.f32 1.0, %v1015
        %v1093 = vsub.f32 1.0, %v762
        %v1094 = vsub.f32 1.0, %v764
        %v1095 = vsub.f32 1.0, %v1019
        %v1096 = vsub.f32 1.0, %v1021
        %v1097 = vsub.f32 1.0, %v768
        %v1098 = vsub.f32 1.0, %v770
        %v1099 = vsub.f32 1.0, %v1025
        %v1100 = vsub.f32 1.0, %v1027
        %v1101 = vsub.f32 1.0, %v774
        %v1102 = vsub.f32 1.0, %v776
        %v1103 = vsub.f32 1.0, %v1031
        %v1104 = vsub.f32 1.0, %v1033
        %v1105 = vsub.f32 1.0, %v780
        %v1106 = vsub.f32 1.0, %v782
        %v1107 = vsub.f32 1.0, %v1037
        %v1108 = vsub.f32 1.0, %v1039
        %v1109 = vsub.f32 1.0, %v786
        %v1110 = vsub.f32 1.0, %v788
        %v1111 = vsub.f32 1.0, %v1043
        %v1112 = vsub.f32 1.0, %v1045
        %v1113 = vsub.f32 1.0, %v792
        %v1114 = vsub.f32 1.0, %v794
        %v1115 = vsub.f32 1.0, %v1049
        %v1116 = vsub.f32 1.0, %v1051
        %v1117 = vadd.f32 %v606, 0.001
        %v1118 = vadd.f32 %v608, 0.001
        %v1119 = vadd.f32 %v863, 0.001
        %v1120 = vadd.f32 %v865, 0.001
        %v1121 = vadd.f32 %v612, 0.001
        %v1122 = vadd.f32 %v614, 0.001
        %v1123 = vadd.f32 %v869, 0.001
        %v1124 = vadd.f32 %v871, 0.001
        %v1125 = vadd.f32 %v618, 0.001
        %v1126 = vadd.f32 %v620, 0.001
        %v1127 = vadd.f32 %v875, 0.001
        %v1128 = vadd.f32 %v877, 0.001
        %v1129 = vadd.f32 %v624, 0.001
        %v1130 = vadd.f32 %v626, 0.001
        %v1131 = vadd.f32 %v881, 0.001
        %v1132 = vadd.f32 %v883, 0.001
        %v1133 = vadd.f32 %v630, 0.001
        %v1134 = vadd.f32 %v632, 0.001
        %v1135 = vadd.f32 %v887, 0.001
        %v1136 = vadd.f32 %v889, 0.001
        %v1137 = vadd.f32 %v636, 0.001
        %v1138 = vadd.f32 %v638, 0.001
        %v1139 = vadd.f32 %v893, 0.001
        %v1140 = vadd.f32 %v895, 0.001
        %v1141 = vadd.f32 %v642, 0.001
        %v1142 = vadd.f32 %v644, 0.001
        %v1143 = vadd.f32 %v899, 0.001
        %v1144 = vadd.f32 %v901, 0.001
        %v1145 = vadd.f32 %v648, 0.001
        %v1146 = vadd.f32 %v650, 0.001
        %v1147 = vadd.f32 %v905, 0.001
        %v1148 = vadd.f32 %v907, 0.001
        %v1149 = vadd.f32 %v654, 0.001
        %v1150 = vadd.f32 %v656, 0.001
        %v1151 = vadd.f32 %v911, 0.001
        %v1152 = vadd.f32 %v913, 0.001
        %v1153 = vadd.f32 %v660, 0.001
        %v1154 = vadd.f32 %v662, 0.001
        %v1155 = vadd.f32 %v917, 0.001
        %v1156 = vadd.f32 %v919, 0.001
        %v1157 = vadd.f32 %v666, 0.001
        %v1158 = vadd.f32 %v668, 0.001
        %v1159 = vadd.f32 %v923, 0.001
        %v1160 = vadd.f32 %v925, 0.001
        %v1161 = vadd.f32 %v672, 0.001
        %v1162 = vadd.f32 %v674, 0.001
        %v1163 = vadd.f32 %v929, 0.001
        %v1164 = vadd.f32 %v931, 0.001
        %v1165 = vadd.f32 %v678, 0.001
        %v1166 = vadd.f32 %v680, 0.001
        %v1167 = vadd.f32 %v935, 0.001
        %v1168 = vadd.f32 %v937, 0.001
        %v1169 = vadd.f32 %v684, 0.001
        %v1170 = vadd.f32 %v686, 0.001
        %v1171 = vadd.f32 %v941, 0.001
        %v1172 = vadd.f32 %v943, 0.001
        %v1173 = vadd.f32 %v690, 0.001
        %v1174 = vadd.f32 %v692, 0.001
        %v1175 = vadd.f32 %v947, 0.001
        %v1176 = vadd.f32 %v949, 0.001
        %v1177 = vadd.f32 %v696, 0.001
        %v1178 = vadd.f32 %v698, 0.001
        %v1179 = vadd.f32 %v953, 0.001
        %v1180 = vadd.f32 %v955, 0.001
        %v1181 = vlog2.pop %v1117
        %v1182 = vmul.f32 %v1181, 0.6931472
        %v1183 = vlog2.pop %v1118
        %v1184 = vmul.f32 %v1183, 0.6931472
        %v1185 = vlog2.pop %v1119
        %v1186 = vmul.f32 %v1185, 0.6931472
        %v1187 = vlog2.pop %v1120
        %v1188 = vmul.f32 %v1187, 0.6931472
        %v1189 = vlog2.pop %v1121
        %v1190 = vmul.f32 %v1189, 0.6931472
        %v1191 = vlog2.pop %v1122
        %v1192 = vmul.f32 %v1191, 0.6931472
        %v1193 = vlog2.pop %v1123
        %v1194 = vmul.f32 %v1193, 0.6931472
        %v1195 = vlog2.pop %v1124
        %v1196 = vmul.f32 %v1195, 0.6931472
        %v1197 = vlog2.pop %v1125
        %v1198 = vmul.f32 %v1197, 0.6931472
        %v1199 = vlog2.pop %v1126
        %v1200 = vmul.f32 %v1199, 0.6931472
        %v1201 = vlog2.pop %v1127
        %v1202 = vmul.f32 %v1201, 0.6931472
        %v1203 = vlog2.pop %v1128
        %v1204 = vmul.f32 %v1203, 0.6931472
        %v1205 = vlog2.pop %v1129
        %v1206 = vmul.f32 %v1205, 0.6931472
        %v1207 = vlog2.pop %v1130
        %v1208 = vmul.f32 %v1207, 0.6931472
        %v1209 = vlog2.pop %v1131
        %v1210 = vmul.f32 %v1209, 0.6931472
        %v1211 = vlog2.pop %v1132
        %v1212 = vmul.f32 %v1211, 0.6931472
        %v1213 = vlog2.pop %v1133
        %v1214 = vmul.f32 %v1213, 0.6931472
        %v1215 = vlog2.pop %v1134
        %v1216 = vmul.f32 %v1215, 0.6931472
        %v1217 = vlog2.pop %v1135
        %v1218 = vmul.f32 %v1217, 0.6931472
        %v1219 = vlog2.pop %v1136
        %v1220 = vmul.f32 %v1219, 0.6931472
        %v1221 = vlog2.pop %v1137
        %v1222 = vmul.f32 %v1221, 0.6931472
        %v1223 = vlog2.pop %v1138
        %v1224 = vmul.f32 %v1223, 0.6931472
        %v1225 = vlog2.pop %v1139
        %v1226 = vmul.f32 %v1225, 0.6931472
        %v1227 = vlog2.pop %v1140
        %v1228 = vmul.f32 %v1227, 0.6931472
        %v1229 = vlog2.pop %v1141
        %v1230 = vmul.f32 %v1229, 0.6931472
        %v1231 = vlog2.pop %v1142
        %v1232 = vmul.f32 %v1231, 0.6931472
        %v1233 = vlog2.pop %v1143
        %v1234 = vmul.f32 %v1233, 0.6931472
        %v1235 = vlog2.pop %v1144
        %v1236 = vmul.f32 %v1235, 0.6931472
        %v1237 = vlog2.pop %v1145
        %v1238 = vmul.f32 %v1237, 0.6931472
        %v1239 = vlog2.pop %v1146
        %v1240 = vmul.f32 %v1239, 0.6931472
        %v1241 = vlog2.pop %v1147
        %v1242 = vmul.f32 %v1241, 0.6931472
        %v1243 = vlog2.pop %v1148
        %v1244 = vmul.f32 %v1243, 0.6931472
        %v1245 = vlog2.pop %v1149
        %v1246 = vmul.f32 %v1245, 0.6931472
        %v1247 = vlog2.pop %v1150
        %v1248 = vmul.f32 %v1247, 0.6931472
        %v1249 = vlog2.pop %v1151
        %v1250 = vmul.f32 %v1249, 0.6931472
        %v1251 = vlog2.pop %v1152
        %v1252 = vmul.f32 %v1251, 0.6931472
        %v1253 = vlog2.pop %v1153
        %v1254 = vmul.f32 %v1253, 0.6931472
        %v1255 = vlog2.pop %v1154
        %v1256 = vmul.f32 %v1255, 0.6931472
        %v1257 = vlog2.pop %v1155
        %v1258 = vmul.f32 %v1257, 0.6931472
        %v1259 = vlog2.pop %v1156
        %v1260 = vmul.f32 %v1259, 0.6931472
        %v1261 = vlog2.pop %v1157
        %v1262 = vmul.f32 %v1261, 0.6931472
        %v1263 = vlog2.pop %v1158
        %v1264 = vmul.f32 %v1263, 0.6931472
        %v1265 = vlog2.pop %v1159
        %v1266 = vmul.f32 %v1265, 0.6931472
        %v1267 = vlog2.pop %v1160
        %v1268 = vmul.f32 %v1267, 0.6931472
        %v1269 = vlog2.pop %v1161
        %v1270 = vmul.f32 %v1269, 0.6931472
        %v1271 = vlog2.pop %v1162
        %v1272 = vmul.f32 %v1271, 0.6931472
        %v1273 = vlog2.pop %v1163
        %v1274 = vmul.f32 %v1273, 0.6931472
        %v1275 = vlog2.pop %v1164
        %v1276 = vmul.f32 %v1275, 0.6931472
        %v1277 = vlog2.pop %v1165
        %v1278 = vmul.f32 %v1277, 0.6931472
        %v1279 = vlog2.pop %v1166
        %v1280 = vmul.f32 %v1279, 0.6931472
        %v1281 = vlog2.pop %v1167
        %v1282 = vmul.f32 %v1281, 0.6931472
        %v1283 = vlog2.pop %v1168
        %v1284 = vmul.f32 %v1283, 0.6931472
        %v1285 = vlog2.pop %v1169
        %v1286 = vmul.f32 %v1285, 0.6931472
        %v1287 = vlog2.pop %v1170
        %v1288 = vmul.f32 %v1287, 0.6931472
        %v1289 = vlog2.pop %v1171
        %v1290 = vmul.f32 %v1289, 0.6931472
        %v1291 = vlog2.pop %v1172
        %v1292 = vmul.f32 %v1291, 0.6931472
        %v1293 = vlog2.pop %v1173
        %v1294 = vmul.f32 %v1293, 0.6931472
        %v1295 = vlog2.pop %v1174
        %v1296 = vmul.f32 %v1295, 0.6931472
        %v1297 = vlog2.pop %v1175
        %v1298 = vmul.f32 %v1297, 0.6931472
        %v1299 = vlog2.pop %v1176
        %v1300 = vmul.f32 %v1299, 0.6931472
        %v1301 = vlog2.pop %v1177
        %v1302 = vmul.f32 %v1301, 0.6931472
        %v1303 = vlog2.pop %v1178
        %v1304 = vmul.f32 %v1303, 0.6931472
        %v1305 = vlog2.pop %v1179
        %v1306 = vmul.f32 %v1305, 0.6931472
        %v1307 = vlog2.pop %v1180
        %v1308 = vmul.f32 %v1307, 0.6931472
        %v1309 = vlog2.pop %v1053
        %v1310 = vmul.f32 %v1309, 0.6931472
        %v1311 = vlog2.pop %v1054
        %v1312 = vmul.f32 %v1311, 0.6931472
        %v1313 = vlog2.pop %v1055
        %v1314 = vmul.f32 %v1313, 0.6931472
        %v1315 = vlog2.pop %v1056
        %v1316 = vmul.f32 %v1315, 0.6931472
        %v1317 = vlog2.pop %v1057
        %v1318 = vmul.f32 %v1317, 0.6931472
        %v1319 = vlog2.pop %v1058
        %v1320 = vmul.f32 %v1319, 0.6931472
        %v1321 = vlog2.pop %v1059
        %v1322 = vmul.f32 %v1321, 0.6931472
        %v1323 = vlog2.pop %v1060
        %v1324 = vmul.f32 %v1323, 0.6931472
        %v1325 = vlog2.pop %v1061
        %v1326 = vmul.f32 %v1325, 0.6931472
        %v1327 = vlog2.pop %v1062
        %v1328 = vmul.f32 %v1327, 0.6931472
        %v1329 = vlog2.pop %v1063
        %v1330 = vmul.f32 %v1329, 0.6931472
        %v1331 = vlog2.pop %v1064
        %v1332 = vmul.f32 %v1331, 0.6931472
        %v1333 = vlog2.pop %v1065
        %v1334 = vmul.f32 %v1333, 0.6931472
        %v1335 = vlog2.pop %v1066
        %v1336 = vmul.f32 %v1335, 0.6931472
        %v1337 = vlog2.pop %v1067
        %v1338 = vmul.f32 %v1337, 0.6931472
        %v1339 = vlog2.pop %v1068
        %v1340 = vmul.f32 %v1339, 0.6931472
        %v1341 = vlog2.pop %v1069
        %v1342 = vmul.f32 %v1341, 0.6931472
        %v1343 = vlog2.pop %v1070
        %v1344 = vmul.f32 %v1343, 0.6931472
        %v1345 = vlog2.pop %v1071
        %v1346 = vmul.f32 %v1345, 0.6931472
        %v1347 = vlog2.pop %v1072
        %v1348 = vmul.f32 %v1347, 0.6931472
        %v1349 = vlog2.pop %v1073
        %v1350 = vmul.f32 %v1349, 0.6931472
        %v1351 = vlog2.pop %v1074
        %v1352 = vmul.f32 %v1351, 0.6931472
        %v1353 = vlog2.pop %v1075
        %v1354 = vmul.f32 %v1353, 0.6931472
        %v1355 = vlog2.pop %v1076
        %v1356 = vmul.f32 %v1355, 0.6931472
        %v1357 = vlog2.pop %v1077
        %v1358 = vmul.f32 %v1357, 0.6931472
        %v1359 = vlog2.pop %v1078
        %v1360 = vmul.f32 %v1359, 0.6931472
        %v1361 = vlog2.pop %v1079
        %v1362 = vmul.f32 %v1361, 0.6931472
        %v1363 = vlog2.pop %v1080
        %v1364 = vmul.f32 %v1363, 0.6931472
        %v1365 = vlog2.pop %v1081
        %v1366 = vmul.f32 %v1365, 0.6931472
        %v1367 = vlog2.pop %v1082
        %v1368 = vmul.f32 %v1367, 0.6931472
        %v1369 = vlog2.pop %v1083
        %v1370 = vmul.f32 %v1369, 0.6931472
        %v1371 = vlog2.pop %v1084
        %v1372 = vmul.f32 %v1371, 0.6931472
        %v1373 = vlog2.pop %v1085
        %v1374 = vmul.f32 %v1373, 0.6931472
        %v1375 = vlog2.pop %v1086
        %v1376 = vmul.f32 %v1375, 0.6931472
        %v1377 = vlog2.pop %v1087
        %v1378 = vmul.f32 %v1377, 0.6931472
        %v1379 = vlog2.pop %v1088
        %v1380 = vmul.f32 %v1379, 0.6931472
        %v1381 = vlog2.pop %v1089
        %v1382 = vmul.f32 %v1381, 0.6931472
        %v1383 = vlog2.pop %v1090
        %v1384 = vmul.f32 %v1383, 0.6931472
        %v1385 = vlog2.pop %v1091
        %v1386 = vmul.f32 %v1385, 0.6931472
        %v1387 = vlog2.pop %v1092
        %v1388 = vmul.f32 %v1387, 0.6931472
        %v1389 = vlog2.pop %v1093
        %v1390 = vmul.f32 %v1389, 0.6931472
        %v1391 = vlog2.pop %v1094
        %v1392 = vmul.f32 %v1391, 0.6931472
        %v1393 = vlog2.pop %v1095
        %v1394 = vmul.f32 %v1393, 0.6931472
        %v1395 = vlog2.pop %v1096
        %v1396 = vmul.f32 %v1395, 0.6931472
        %v1397 = vlog2.pop %v1097
        %v1398 = vmul.f32 %v1397, 0.6931472
        %v1399 = vlog2.pop %v1098
        %v1400 = vmul.f32 %v1399, 0.6931472
        %v1401 = vlog2.pop %v1099
        %v1402 = vmul.f32 %v1401, 0.6931472
        %v1403 = vlog2.pop %v1100
        %v1404 = vmul.f32 %v1403, 0.6931472
        %v1405 = vlog2.pop %v1101
        %v1406 = vmul.f32 %v1405, 0.6931472
        %v1407 = vlog2.pop %v1102
        %v1408 = vmul.f32 %v1407, 0.6931472
        %v1409 = vlog2.pop %v1103
        %v1410 = vmul.f32 %v1409, 0.6931472
        %v1411 = vlog2.pop %v1104
        %v1412 = vmul.f32 %v1411, 0.6931472
        %v1413 = vlog2.pop %v1105
        %v1414 = vmul.f32 %v1413, 0.6931472
        %v1415 = vlog2.pop %v1106
        %v1416 = vmul.f32 %v1415, 0.6931472
        %v1417 = vlog2.pop %v1107
        %v1418 = vmul.f32 %v1417, 0.6931472
        %v1419 = vlog2.pop %v1108
        %v1420 = vmul.f32 %v1419, 0.6931472
        %v1421 = vlog2.pop %v1109
        %v1422 = vmul.f32 %v1421, 0.6931472
        %v1423 = vlog2.pop %v1110
        %v1424 = vmul.f32 %v1423, 0.6931472
        %v1425 = vlog2.pop %v1111
        %v1426 = vmul.f32 %v1425, 0.6931472
        %v1427 = vlog2.pop %v1112
        %v1428 = vmul.f32 %v1427, 0.6931472
        %v1429 = vlog2.pop %v1113
        %v1430 = vmul.f32 %v1429, 0.6931472
        %v1431 = vlog2.pop %v1114
        %v1432 = vmul.f32 %v1431, 0.6931472
        %v1433 = vlog2.pop %v1115
        %v1434 = vmul.f32 %v1433, 0.6931472
        %v1435 = vlog2.pop %v1116
        %v1436 = vmul.f32 %v1435, 0.6931472
        %v1437 = vsub.f32 %v1182, %v1310
        %v1438 = vsub.f32 %v1184, %v1312
        %v1439 = vsub.f32 %v1186, %v1314
        %v1440 = vsub.f32 %v1188, %v1316
        %v1441 = vsub.f32 %v1190, %v1318
        %v1442 = vsub.f32 %v1192, %v1320
        %v1443 = vsub.f32 %v1194, %v1322
        %v1444 = vsub.f32 %v1196, %v1324
        %v1445 = vsub.f32 %v1198, %v1326
        %v1446 = vsub.f32 %v1200, %v1328
        %v1447 = vsub.f32 %v1202, %v1330
        %v1448 = vsub.f32 %v1204, %v1332
        %v1449 = vsub.f32 %v1206, %v1334
        %v1450 = vsub.f32 %v1208, %v1336
        %v1451 = vsub.f32 %v1210, %v1338
        %v1452 = vsub.f32 %v1212, %v1340
        %v1453 = vsub.f32 %v1214, %v1342
        %v1454 = vsub.f32 %v1216, %v1344
        %v1455 = vsub.f32 %v1218, %v1346
        %v1456 = vsub.f32 %v1220, %v1348
        %v1457 = vsub.f32 %v1222, %v1350
        %v1458 = vsub.f32 %v1224, %v1352
        %v1459 = vsub.f32 %v1226, %v1354
        %v1460 = vsub.f32 %v1228, %v1356
        %v1461 = vsub.f32 %v1230, %v1358
        %v1462 = vsub.f32 %v1232, %v1360
        %v1463 = vsub.f32 %v1234, %v1362
        %v1464 = vsub.f32 %v1236, %v1364
        %v1465 = vsub.f32 %v1238, %v1366
        %v1466 = vsub.f32 %v1240, %v1368
        %v1467 = vsub.f32 %v1242, %v1370
        %v1468 = vsub.f32 %v1244, %v1372
        %v1469 = vsub.f32 %v1246, %v1374
        %v1470 = vsub.f32 %v1248, %v1376
        %v1471 = vsub.f32 %v1250, %v1378
        %v1472 = vsub.f32 %v1252, %v1380
        %v1473 = vsub.f32 %v1254, %v1382
        %v1474 = vsub.f32 %v1256, %v1384
        %v1475 = vsub.f32 %v1258, %v1386
        %v1476 = vsub.f32 %v1260, %v1388
        %v1477 = vsub.f32 %v1262, %v1390
        %v1478 = vsub.f32 %v1264, %v1392
        %v1479 = vsub.f32 %v1266, %v1394
        %v1480 = vsub.f32 %v1268, %v1396
        %v1481 = vsub.f32 %v1270, %v1398
        %v1482 = vsub.f32 %v1272, %v1400
        %v1483 = vsub.f32 %v1274, %v1402
        %v1484 = vsub.f32 %v1276, %v1404
        %v1485 = vsub.f32 %v1278, %v1406
        %v1486 = vsub.f32 %v1280, %v1408
        %v1487 = vsub.f32 %v1282, %v1410
        %v1488 = vsub.f32 %v1284, %v1412
        %v1489 = vsub.f32 %v1286, %v1414
        %v1490 = vsub.f32 %v1288, %v1416
        %v1491 = vsub.f32 %v1290, %v1418
        %v1492 = vsub.f32 %v1292, %v1420
        %v1493 = vsub.f32 %v1294, %v1422
        %v1494 = vsub.f32 %v1296, %v1424
        %v1495 = vsub.f32 %v1298, %v1426
        %v1496 = vsub.f32 %v1300, %v1428
        %v1497 = vsub.f32 %v1302, %v1430
        %v1498 = vsub.f32 %v1304, %v1432
        %v1499 = vsub.f32 %v1306, %v1434
        %v1500 = vsub.f32 %v1308, %v1436
        %v1501 = vmax.f32 %v1437, 0.0
        %v1502 = vmax.f32 %v1438, 0.0
        %v1503 = vmax.f32 %v1439, 0.0
        %v1504 = vmax.f32 %v1440, 0.0
        %v1505 = vmax.f32 %v1441, 0.0
        %v1506 = vmax.f32 %v1442, 0.0
        %v1507 = vmax.f32 %v1443, 0.0
        %v1508 = vmax.f32 %v1444, 0.0
        %v1509 = vmax.f32 %v1445, 0.0
        %v1510 = vmax.f32 %v1446, 0.0
        %v1511 = vmax.f32 %v1447, 0.0
        %v1512 = vmax.f32 %v1448, 0.0
        %v1513 = vmax.f32 %v1449, 0.0
        %v1514 = vmax.f32 %v1450, 0.0
        %v1515 = vmax.f32 %v1451, 0.0
        %v1516 = vmax.f32 %v1452, 0.0
        %v1517 = vmax.f32 %v1453, 0.0
        %v1518 = vmax.f32 %v1454, 0.0
        %v1519 = vmax.f32 %v1455, 0.0
        %v1520 = vmax.f32 %v1456, 0.0
        %v1521 = vmax.f32 %v1457, 0.0
        %v1522 = vmax.f32 %v1458, 0.0
        %v1523 = vmax.f32 %v1459, 0.0
        %v1524 = vmax.f32 %v1460, 0.0
        %v1525 = vmax.f32 %v1461, 0.0
        %v1526 = vmax.f32 %v1462, 0.0
        %v1527 = vmax.f32 %v1463, 0.0
        %v1528 = vmax.f32 %v1464, 0.0
        %v1529 = vmax.f32 %v1465, 0.0
        %v1530 = vmax.f32 %v1466, 0.0
        %v1531 = vmax.f32 %v1467, 0.0
        %v1532 = vmax.f32 %v1468, 0.0
        %v1533 = vmax.f32 %v1469, 0.0
        %v1534 = vmax.f32 %v1470, 0.0
        %v1535 = vmax.f32 %v1471, 0.0
        %v1536 = vmax.f32 %v1472, 0.0
        %v1537 = vmax.f32 %v1473, 0.0
        %v1538 = vmax.f32 %v1474, 0.0
        %v1539 = vmax.f32 %v1475, 0.0
        %v1540 = vmax.f32 %v1476, 0.0
        %v1541 = vmax.f32 %v1477, 0.0
        %v1542 = vmax.f32 %v1478, 0.0
        %v1543 = vmax.f32 %v1479, 0.0
        %v1544 = vmax.f32 %v1480, 0.0
        %v1545 = vmax.f32 %v1481, 0.0
        %v1546 = vmax.f32 %v1482, 0.0
        %v1547 = vmax.f32 %v1483, 0.0
        %v1548 = vmax.f32 %v1484, 0.0
        %v1549 = vmax.f32 %v1485, 0.0
        %v1550 = vmax.f32 %v1486, 0.0
        %v1551 = vmax.f32 %v1487, 0.0
        %v1552 = vmax.f32 %v1488, 0.0
        %v1553 = vmax.f32 %v1489, 0.0
        %v1554 = vmax.f32 %v1490, 0.0
        %v1555 = vmax.f32 %v1491, 0.0
        %v1556 = vmax.f32 %v1492, 0.0
        %v1557 = vmax.f32 %v1493, 0.0
        %v1558 = vmax.f32 %v1494, 0.0
        %v1559 = vmax.f32 %v1495, 0.0
        %v1560 = vmax.f32 %v1496, 0.0
        %v1561 = vmax.f32 %v1497, 0.0
        %v1562 = vmax.f32 %v1498, 0.0
        %v1563 = vmax.f32 %v1499, 0.0
        %v1564 = vmax.f32 %v1500, 0.0
        %v1565 = vadd.f32 %v1501, %v1502
        %v1566 = vadd.f32 %v1565, %v1503
        %v1567 = vadd.f32 %v1566, %v1504
        %v1568 = vadd.f32 %v1567, %v1505
        %v1569 = vadd.f32 %v1568, %v1506
        %v1570 = vadd.f32 %v1569, %v1507
        %v1571 = vadd.f32 %v1570, %v1508
        %v1572 = vadd.f32 %v1571, %v1509
        %v1573 = vadd.f32 %v1572, %v1510
        %v1574 = vadd.f32 %v1573, %v1511
        %v1575 = vadd.f32 %v1574, %v1512
        %v1576 = vadd.f32 %v1575, %v1513
        %v1577 = vadd.f32 %v1576, %v1514
        %v1578 = vadd.f32 %v1577, %v1515
        %v1579 = vadd.f32 %v1578, %v1516
        %v1580 = vadd.f32 %v1579, %v1517
        %v1581 = vadd.f32 %v1580, %v1518
        %v1582 = vadd.f32 %v1581, %v1519
        %v1583 = vadd.f32 %v1582, %v1520
        %v1584 = vadd.f32 %v1583, %v1521
        %v1585 = vadd.f32 %v1584, %v1522
        %v1586 = vadd.f32 %v1585, %v1523
        %v1587 = vadd.f32 %v1586, %v1524
        %v1588 = vadd.f32 %v1587, %v1525
        %v1589 = vadd.f32 %v1588, %v1526
        %v1590 = vadd.f32 %v1589, %v1527
        %v1591 = vadd.f32 %v1590, %v1528
        %v1592 = vadd.f32 %v1591, %v1529
        %v1593 = vadd.f32 %v1592, %v1530
        %v1594 = vadd.f32 %v1593, %v1531
        %v1595 = vadd.f32 %v1594, %v1532
        %v1596 = vadd.f32 %v1595, %v1533
        %v1597 = vadd.f32 %v1596, %v1534
        %v1598 = vadd.f32 %v1597, %v1535
        %v1599 = vadd.f32 %v1598, %v1536
        %v1600 = vadd.f32 %v1599, %v1537
        %v1601 = vadd.f32 %v1600, %v1538
        %v1602 = vadd.f32 %v1601, %v1539
        %v1603 = vadd.f32 %v1602, %v1540
        %v1604 = vadd.f32 %v1603, %v1541
        %v1605 = vadd.f32 %v1604, %v1542
        %v1606 = vadd.f32 %v1605, %v1543
        %v1607 = vadd.f32 %v1606, %v1544
        %v1608 = vadd.f32 %v1607, %v1545
        %v1609 = vadd.f32 %v1608, %v1546
        %v1610 = vadd.f32 %v1609, %v1547
        %v1611 = vadd.f32 %v1610, %v1548
        %v1612 = vadd.f32 %v1611, %v1549
        %v1613 = vadd.f32 %v1612, %v1550
        %v1614 = vadd.f32 %v1613, %v1551
        %v1615 = vadd.f32 %v1614, %v1552
        %v1616 = vadd.f32 %v1615, %v1553
        %v1617 = vadd.f32 %v1616, %v1554
        %v1618 = vadd.f32 %v1617, %v1555
        %v1619 = vadd.f32 %v1618, %v1556
        %v1620 = vadd.f32 %v1619, %v1557
        %v1621 = vadd.f32 %v1620, %v1558
        %v1622 = vadd.f32 %v1621, %v1559
        %v1623 = vadd.f32 %v1622, %v1560
        %v1624 = vadd.f32 %v1623, %v1561
        %v1625 = vadd.f32 %v1624, %v1562
        %v1626 = vadd.f32 %v1625, %v1563
        %v1627 = vadd.f32 %v1626, %v1564
        %1628 = vadd.xlane.f32.xlu0 %v1627
        %v1629 = vpop.xlane.xlu0 %1628
        %v1630 = vrot.slane %v1629, 4
        %v1631 = vadd.f32 %v1629, %v1630
        %v1632 = vrot.slane %v1631, 2
        %v1633 = vadd.f32 %v1631, %v1632
        %v1634 = vrot.slane %v1633, 1
        %v1635 = vadd.f32 %v1633, %v1634
        %s1636 = vtos %v1635
        %v1637 = vld [vmem:[%s259] sm:$0x1]
        %s1638 = smul.f32 %s1636, 0.001
        %s1639 = sadd.f32 %s365, %s1638
        %v1640 = vstv %s1639
        %v1641 = vadd.f32 %v1637, %v1640
        %vm1642 = vcmask 0
        %1643 = vst.msk [vmem:[%s259] sm:$0x1] %vm1642, %v1641
        %p1644 = scmp.lt.s32.totalorder %s18, 1
        %s1645 = scalar_select %p1644, %s18, 1
        %s1646 = scalar_lea.vmem %s3, %s1645
        // Predicated region
        $region60: #{tpu_custom_call.1} parent=50 // pred_check
          %p1647 = pneg %p121
        $region61: #{tpu_custom_call.1} parent=50 // pred_check_branch
          %1649 = sbr.rel (%p1647) target = $region63
        $region62: #{tpu_custom_call.1} parent=50 // pred_region
          _
        $region63: #{tpu_custom_call.1} parent=50 // pred_fallthru
          _
      $region51: #{tpu_custom_call.1} parent=5 // pred_fallthru
        _
      %p1650 = scmp.le.s32.totalorder 2, %s9
      // Predicated region
      $region64: #{tpu_custom_call.1} parent=5 // pred_check
        %p1651 = pneg %p1650
      $region65: #{tpu_custom_call.1} parent=5 // pred_check_branch
        %1653 = sbr.rel (%p1651) target = $region67
      $region66: #{tpu_custom_call.1} parent=5 // pred_region
        %s1654 = ssub.s32 %s9, 2
        // Predicated region
        $region68: #{tpu_custom_call.1} parent=66 // pred_check
          %p1655 = pneg %p127
        $region69: #{tpu_custom_call.1} parent=66 // pred_check_branch
          %1657 = sbr.rel (%p1655) target = $region71
        $region70: #{tpu_custom_call.1} parent=66 // pred_region
          %p1658 = scmp.lt.s32.totalorder %s20, 1
          %s1659 = scalar_select %p1658, %s20, 1
          %s1660 = scalar_lea.vmem %s3, %s1659
        $region71: #{tpu_custom_call.1} parent=66 // pred_fallthru
          _
      $region67: #{tpu_custom_call.1} parent=5 // pred_fallthru
        _
    $region6: #{tpu_custom_call.1} parent=1 // loop_footer
      %s13 = sadd.s32 1, %s9
    $region7: #{tpu_custom_call.1} parent=1 // loop_footer_branch
      %8 = sbr.rel target = $region3
    $region8: #{tpu_custom_call.1} parent=1 // loop_exit
      _

</llo_original>
